<compile_context>
chip_gen: v7x
topology: tpu7x:2x2x1
jax: 0.10.0
libtpu: 0.0.40
codegen_flags: <defaults>
</compile_context>

<pallas_src>
import jax
import jax.numpy as jnp
from jax.experimental import pallas as pl
from jax.experimental.pallas import tpu as pltpu


def _lstm_encoder_kernel(xg_ref, whh0_ref, w1_ref, b1_ref, gamma_ref, beta_ref,
                         out_ref):
    """Whole recurrence in one invocation.

    xg_ref   : (T, B, 4H)  precomputed x @ W_ih0^T + b0 (layer-0 input gates)
    whh0_ref : (H, 4H)     layer-0 recurrent weight (pre-transposed)
    w1_ref   : (2H, 4H)    fused layer-1 weight [W_ih1^T ; W_hh1^T]
    b1_ref   : (1, 4H)     layer-1 combined bias (b_ih1 + b_hh1)
    gamma/beta: (1, H)     LayerNorm affine
    out_ref  : (B, H)
    """
    T = xg_ref.shape[0]
    B, H = out_ref.shape

    # Loop-invariant weights: loaded into vregs once, before the time loop.
    whh0 = whh0_ref[...]
    w1 = w1_ref[...]
    b1 = b1_ref[...]

    def gates_to_hc(gates, c):
        # PyTorch gate order (i, f, g, o); 4H == 128 -> static lane slices.
        # 2 EUP launches (full-tile sigmoid + candidate tanh) instead of 4
        # quarter-tile ones; the slicing rides free on VPU slots.
        sig = jax.nn.sigmoid(gates)
        g = jnp.tanh(gates[:, 2 * H:3 * H])
        i = sig[:, 0:H]
        f = sig[:, H:2 * H]
        o = sig[:, 3 * H:4 * H]
        c_new = f * c + i * g
        h_new = o * jnp.tanh(c_new)
        return h_new, c_new

    def step(t, carry):
        h0, c0, h1, c1 = carry
        # Layer 0: only the recurrent matmul is left on the serial chain.
        g0 = jnp.dot(h0, whh0, preferred_element_type=jnp.float32) + xg_ref[t]
        h0n, c0n = gates_to_hc(g0, c0)
        # Layer 1 (eval-mode dropout on h0n is identity): one fused matmul on
        # the lane-concatenated [h0n | h1] instead of two dots + VPU add.
        hcat = jnp.concatenate([h0n, h1], axis=-1)            # (B, 2H)
        g1 = jnp.dot(hcat, w1, preferred_element_type=jnp.float32) + b1
        h1n, c1n = gates_to_hc(g1, c1)
        return h0n, c0n, h1n, c1n

    zero = jnp.zeros((B, H), jnp.float32)
    # Bounded unroll: serial dependency chain, so unroll beyond a few steps
    # only inflates code size / compile time / vreg live ranges.
    _, _, h1, _ = jax.lax.fori_loop(0, T, step, (zero, zero, zero, zero),
                                    unroll=min(T, 8))

    # LayerNorm of the top layer's last hidden state (eps = 1e-5).
    mean = jnp.mean(h1, axis=-1, keepdims=True)
    var = jnp.mean((h1 - mean) ** 2, axis=-1, keepdims=True)
    normed = (h1 - mean) * jax.lax.rsqrt(var + 1e-5)
    out_ref[...] = (normed * gamma_ref[...] + beta_ref[...]).astype(out_ref.dtype)


@jax.jit
def lstm_encoder_pallas(x, params):
    """x: [B, T, D_in] float32; returns [B, H] float32."""
    B, T, Din = x.shape
    H = params["gamma"].shape[-1]

    # Hoist the non-recurrent layer-0 input projection out of the recurrence:
    # one batched matmul over all timesteps (bias b0 folded in), shaped
    # (T, B, 4H) so the kernel reads one timestep with a leading-dim index.
    # TODO(synk): at large T*B stream xg through the kernel over a T grid
    # (BlockSpec((Tc,B,4H), ...), h/c in VMEM scratch) instead of
    # materializing the full (T,B,4H) tensor (it is ~4H/Din larger than x).
    xg = jnp.einsum("btd,dg->tbg", x, params["wih0"],
                    precision=jax.lax.Precision.HIGHEST) + params["b0"]

    # Fused layer-1 weight: g1 = [h0 | h1] @ [W_ih1^T ; W_hh1^T] + b1.
    w1 = jnp.concatenate([params["wih1"], params["whh1"]], axis=0)  # (2H, 4H)

    vmem = pl.BlockSpec(memory_space=pltpu.MemorySpace.VMEM)
    kernel = pl.pallas_call(
        _lstm_encoder_kernel,
        out_shape=jax.ShapeDtypeStruct((B, H), jnp.float32),
        in_specs=[vmem] * 6,
        out_specs=vmem,
        # Explicit scoped-VMEM budget (v5e default is only 16 MiB); tiny here,
        # but keeps the grid-less all-in-VMEM design safe as shapes grow.
        compiler_params=pltpu.CompilerParams(
            vmem_limit_bytes=32 * 1024 * 1024),
    )
    return kernel(xg, params["whh0"], w1, params["b1"],
                  params["gamma"], params["beta"])


def lstm_encoder_ref(x, params):
    """Pure-JAX reference (torch.nn.LSTM eval-mode forward + LayerNorm)."""
    B, T, Din = x.shape
    H = params["gamma"].shape[-1]
    hp = jax.lax.Precision.HIGHEST

    def cell(inp, h, c, wih, whh, b):
        gates = (jnp.dot(inp, wih, precision=hp)
                 + jnp.dot(h, whh, precision=hp) + b)
        i = jax.nn.sigmoid(gates[:, 0:H])
        f = jax.nn.sigmoid(gates[:, H:2 * H])
        g = jnp.tanh(gates[:, 2 * H:3 * H])
        o = jax.nn.sigmoid(gates[:, 3 * H:4 * H])
        c_new = f * c + i * g
        return o * jnp.tanh(c_new), c_new

    h0 = c0 = h1 = c1 = jnp.zeros((B, H), jnp.float32)
    for t in range(T):
        h0, c0 = cell(x[:, t, :], h0, c0, params["wih0"], params["whh0"], params["b0"])
        h1, c1 = cell(h0, h1, c1, params["wih1"], params["whh1"], params["b1"])
    mean = jnp.mean(h1, axis=-1, keepdims=True)
    var = jnp.mean((h1 - mean) ** 2, axis=-1, keepdims=True)
    return (h1 - mean) * jax.lax.rsqrt(var + 1e-5) * params["gamma"] + params["beta"]


def init_params(key, input_dim=6, d_model=32):
    """Deterministic synthetic init (PyTorch-style uniform(-1/sqrt(H), 1/sqrt(H))).
    Weights stored pre-transposed: (in_features, 4H); biases combined (b_ih+b_hh)."""
    H = d_model
    bound = 1.0 / jnp.sqrt(jnp.float32(H))
    ks = jax.random.split(key, 12)
    u = lambda k, s: jax.random.uniform(k, s, jnp.float32, -bound, bound)
    params = {
        "wih0": u(ks[0], (input_dim, 4 * H)),
        "whh0": u(ks[1], (H, 4 * H)),
        "b0":   u(ks[2], (1, 4 * H)) + u(ks[3], (1, 4 * H)),
        "wih1": u(ks[4], (H, 4 * H)),
        "whh1": u(ks[5], (H, 4 * H)),
        "b1":   u(ks[6], (1, 4 * H)) + u(ks[7], (1, 4 * H)),
        "gamma": jnp.ones((1, H), jnp.float32),
        "beta":  jnp.zeros((1, H), jnp.float32),
    }
    return params


if __name__ == "__main__":
    B, T, Din, H = 2, 8, 6, 32
    key = jax.random.PRNGKey(0)
    kx, kp = jax.random.split(key)
    x = jax.random.normal(kx, (B, T, Din), jnp.float32)
    params = init_params(kp, input_dim=Din, d_model=H)

    out = jax.block_until_ready(lstm_encoder_pallas(x, params))
    ref = lstm_encoder_ref(x, params)
    assert out.shape == (B, H)
    assert jnp.allclose(out, ref, atol=1e-4, rtol=1e-4), "mismatch vs pure-JAX reference"
    print("KERNEL_OK")
</pallas_src>

<mosaic_0001>
module attributes {stable_mosaic.version = 11 : i64} {
  func.func @_lstm_encoder_kernel(%arg0: memref<8x2x128xf32, #tpu.memory_space<vmem>>, %arg1: memref<32x128xf32, #tpu.memory_space<vmem>>, %arg2: memref<64x128xf32, #tpu.memory_space<vmem>>, %arg3: memref<1x128xf32, #tpu.memory_space<vmem>>, %arg4: memref<1x32xf32, #tpu.memory_space<vmem>>, %arg5: memref<1x32xf32, #tpu.memory_space<vmem>>, %arg6: memref<2x32xf32, #tpu.memory_space<vmem>>) attributes {dimension_semantics = [], scalar_prefetch = 0 : i64, scratch_operands = 0 : i64, tpu.core_type = #tpu.core_type<tc>} {
    %c0 = arith.constant 0 : index
    %c0_0 = arith.constant 0 : index
    %0 = vector.load %arg1[%c0, %c0_0] : memref<32x128xf32, #tpu.memory_space<vmem>>, vector<32x128xf32>
    %c0_1 = arith.constant 0 : index
    %c0_2 = arith.constant 0 : index
    %1 = vector.load %arg2[%c0_1, %c0_2] : memref<64x128xf32, #tpu.memory_space<vmem>>, vector<64x128xf32>
    %c0_3 = arith.constant 0 : index
    %c0_4 = arith.constant 0 : index
    %2 = vector.load %arg3[%c0_3, %c0_4] : memref<1x128xf32, #tpu.memory_space<vmem>>, vector<1x128xf32>
    %cst = arith.constant 0.000000e+00 : f32
    %3 = vector.broadcast %cst : f32 to vector<2x32xf32>
    %c0_i32 = arith.constant 0 : i32
    %cst_5 = arith.constant dense<0.000000e+00> : vector<2x128xf32>
    %4 = tpu.matmul %3, %0, %cst_5 {dimension_numbers = #tpu.dot_dimension_numbers<[1], [0], [0], [1], [0, 0, 1, 1], [], []>} : vector<2x32xf32>, vector<32x128xf32>, vector<2x128xf32> -> vector<2x128xf32>
    %5 = arith.index_cast %c0_i32 : i32 to index
    %c0_6 = arith.constant 0 : index
    %c0_7 = arith.constant 0 : index
    %6 = vector.load %arg0[%5, %c0_6, %c0_7] : memref<8x2x128xf32, #tpu.memory_space<vmem>>, vector<1x2x128xf32>
    %7 = vector.shape_cast %6 : vector<1x2x128xf32> to vector<2x128xf32>
    %8 = arith.addf %4, %7 : vector<2x128xf32>
    %9 = arith.negf %8 : vector<2x128xf32>
    %10 = math.exp %9 : vector<2x128xf32>
    %cst_8 = arith.constant 1.000000e+00 : f32
    %11 = vector.broadcast %cst_8 : f32 to vector<2x128xf32>
    %12 = arith.addf %11, %10 : vector<2x128xf32>
    %13 = arith.divf %11, %12 : vector<2x128xf32>
    %14 = vector.extract_strided_slice %8 {offsets = [0, 64], sizes = [2, 32], strides = [1, 1]} : vector<2x128xf32> to vector<2x32xf32>
    %15 = math.tanh %14 : vector<2x32xf32>
    %16 = vector.extract_strided_slice %13 {offsets = [0, 0], sizes = [2, 32], strides = [1, 1]} : vector<2x128xf32> to vector<2x32xf32>
    %17 = vector.extract_strided_slice %13 {offsets = [0, 32], sizes = [2, 32], strides = [1, 1]} : vector<2x128xf32> to vector<2x32xf32>
    %18 = vector.extract_strided_slice %13 {offsets = [0, 96], sizes = [2, 32], strides = [1, 1]} : vector<2x128xf32> to vector<2x32xf32>
    %19 = arith.mulf %17, %3 : vector<2x32xf32>
    %20 = arith.mulf %16, %15 : vector<2x32xf32>
    %21 = arith.addf %19, %20 : vector<2x32xf32>
    %22 = math.tanh %21 : vector<2x32xf32>
    %23 = arith.mulf %18, %22 : vector<2x32xf32>
    %24 = tpu.concatenate %23, %3 in 1 : vector<2x32xf32>, vector<2x32xf32> -> vector<2x64xf32>
    %cst_9 = arith.constant dense<0.000000e+00> : vector<2x128xf32>
    %25 = tpu.matmul %24, %1, %cst_9 {dimension_numbers = #tpu.dot_dimension_numbers<[1], [0], [0], [1], [0, 0, 1, 1], [], []>} : vector<2x64xf32>, vector<64x128xf32>, vector<2x128xf32> -> vector<2x128xf32>
    %26 = vector.broadcast %2 : vector<1x128xf32> to vector<2x128xf32>
    %27 = arith.addf %25, %26 : vector<2x128xf32>
    %28 = arith.negf %27 : vector<2x128xf32>
    %29 = math.exp %28 : vector<2x128xf32>
    %cst_10 = arith.constant 1.000000e+00 : f32
    %30 = vector.broadcast %cst_10 : f32 to vector<2x128xf32>
    %31 = arith.addf %30, %29 : vector<2x128xf32>
    %32 = arith.divf %30, %31 : vector<2x128xf32>
    %33 = vector.extract_strided_slice %27 {offsets = [0, 64], sizes = [2, 32], strides = [1, 1]} : vector<2x128xf32> to vector<2x32xf32>
    %34 = math.tanh %33 : vector<2x32xf32>
    %35 = vector.extract_strided_slice %32 {offsets = [0, 0], sizes = [2, 32], strides = [1, 1]} : vector<2x128xf32> to vector<2x32xf32>
    %36 = vector.extract_strided_slice %32 {offsets = [0, 32], sizes = [2, 32], strides = [1, 1]} : vector<2x128xf32> to vector<2x32xf32>
    %37 = vector.extract_strided_slice %32 {offsets = [0, 96], sizes = [2, 32], strides = [1, 1]} : vector<2x128xf32> to vector<2x32xf32>
    %38 = arith.mulf %36, %3 : vector<2x32xf32>
    %39 = arith.mulf %35, %34 : vector<2x32xf32>
    %40 = arith.addf %38, %39 : vector<2x32xf32>
    %41 = math.tanh %40 : vector<2x32xf32>
    %42 = arith.mulf %37, %41 : vector<2x32xf32>
    %c1_i32 = arith.constant 1 : i32
    %cst_11 = arith.constant dense<0.000000e+00> : vector<2x128xf32>
    %43 = tpu.matmul %23, %0, %cst_11 {dimension_numbers = #tpu.dot_dimension_numbers<[1], [0], [0], [1], [0, 0, 1, 1], [], []>} : vector<2x32xf32>, vector<32x128xf32>, vector<2x128xf32> -> vector<2x128xf32>
    %44 = arith.index_cast %c1_i32 : i32 to index
    %c0_12 = arith.constant 0 : index
    %c0_13 = arith.constant 0 : index
    %45 = vector.load %arg0[%44, %c0_12, %c0_13] : memref<8x2x128xf32, #tpu.memory_space<vmem>>, vector<1x2x128xf32>
    %46 = vector.shape_cast %45 : vector<1x2x128xf32> to vector<2x128xf32>
    %47 = arith.addf %43, %46 : vector<2x128xf32>
    %48 = arith.negf %47 : vector<2x128xf32>
    %49 = math.exp %48 : vector<2x128xf32>
    %cst_14 = arith.constant 1.000000e+00 : f32
    %50 = vector.broadcast %cst_14 : f32 to vector<2x128xf32>
    %51 = arith.addf %50, %49 : vector<2x128xf32>
    %52 = arith.divf %50, %51 : vector<2x128xf32>
    %53 = vector.extract_strided_slice %47 {offsets = [0, 64], sizes = [2, 32], strides = [1, 1]} : vector<2x128xf32> to vector<2x32xf32>
    %54 = math.tanh %53 : vector<2x32xf32>
    %55 = vector.extract_strided_slice %52 {offsets = [0, 0], sizes = [2, 32], strides = [1, 1]} : vector<2x128xf32> to vector<2x32xf32>
    %56 = vector.extract_strided_slice %52 {offsets = [0, 32], sizes = [2, 32], strides = [1, 1]} : vector<2x128xf32> to vector<2x32xf32>
    %57 = vector.extract_strided_slice %52 {offsets = [0, 96], sizes = [2, 32], strides = [1, 1]} : vector<2x128xf32> to vector<2x32xf32>
    %58 = arith.mulf %56, %21 : vector<2x32xf32>
    %59 = arith.mulf %55, %54 : vector<2x32xf32>
    %60 = arith.addf %58, %59 : vector<2x32xf32>
    %61 = math.tanh %60 : vector<2x32xf32>
    %62 = arith.mulf %57, %61 : vector<2x32xf32>
    %63 = tpu.concatenate %62, %42 in 1 : vector<2x32xf32>, vector<2x32xf32> -> vector<2x64xf32>
    %cst_15 = arith.constant dense<0.000000e+00> : vector<2x128xf32>
    %64 = tpu.matmul %63, %1, %cst_15 {dimension_numbers = #tpu.dot_dimension_numbers<[1], [0], [0], [1], [0, 0, 1, 1], [], []>} : vector<2x64xf32>, vector<64x128xf32>, vector<2x128xf32> -> vector<2x128xf32>
    %65 = vector.broadcast %2 : vector<1x128xf32> to vector<2x128xf32>
    %66 = arith.addf %64, %65 : vector<2x128xf32>
    %67 = arith.negf %66 : vector<2x128xf32>
    %68 = math.exp %67 : vector<2x128xf32>
    %cst_16 = arith.constant 1.000000e+00 : f32
    %69 = vector.broadcast %cst_16 : f32 to vector<2x128xf32>
    %70 = arith.addf %69, %68 : vector<2x128xf32>
    %71 = arith.divf %69, %70 : vector<2x128xf32>
    %72 = vector.extract_strided_slice %66 {offsets = [0, 64], sizes = [2, 32], strides = [1, 1]} : vector<2x128xf32> to vector<2x32xf32>
    %73 = math.tanh %72 : vector<2x32xf32>
    %74 = vector.extract_strided_slice %71 {offsets = [0, 0], sizes = [2, 32], strides = [1, 1]} : vector<2x128xf32> to vector<2x32xf32>
    %75 = vector.extract_strided_slice %71 {offsets = [0, 32], sizes = [2, 32], strides = [1, 1]} : vector<2x128xf32> to vector<2x32xf32>
    %76 = vector.extract_strided_slice %71 {offsets = [0, 96], sizes = [2, 32], strides = [1, 1]} : vector<2x128xf32> to vector<2x32xf32>
    %77 = arith.mulf %75, %40 : vector<2x32xf32>
    %78 = arith.mulf %74, %73 : vector<2x32xf32>
    %79 = arith.addf %77, %78 : vector<2x32xf32>
    %80 = math.tanh %79 : vector<2x32xf32>
    %81 = arith.mulf %76, %80 : vector<2x32xf32>
    %c2_i32 = arith.constant 2 : i32
    %cst_17 = arith.constant dense<0.000000e+00> : vector<2x128xf32>
    %82 = tpu.matmul %62, %0, %cst_17 {dimension_numbers = #tpu.dot_dimension_numbers<[1], [0], [0], [1], [0, 0, 1, 1], [], []>} : vector<2x32xf32>, vector<32x128xf32>, vector<2x128xf32> -> vector<2x128xf32>
    %83 = arith.index_cast %c2_i32 : i32 to index
    %c0_18 = arith.constant 0 : index
    %c0_19 = arith.constant 0 : index
    %84 = vector.load %arg0[%83, %c0_18, %c0_19] : memref<8x2x128xf32, #tpu.memory_space<vmem>>, vector<1x2x128xf32>
    %85 = vector.shape_cast %84 : vector<1x2x128xf32> to vector<2x128xf32>
    %86 = arith.addf %82, %85 : vector<2x128xf32>
    %87 = arith.negf %86 : vector<2x128xf32>
    %88 = math.exp %87 : vector<2x128xf32>
    %cst_20 = arith.constant 1.000000e+00 : f32
    %89 = vector.broadcast %cst_20 : f32 to vector<2x128xf32>
    %90 = arith.addf %89, %88 : vector<2x128xf32>
    %91 = arith.divf %89, %90 : vector<2x128xf32>
    %92 = vector.extract_strided_slice %86 {offsets = [0, 64], sizes = [2, 32], strides = [1, 1]} : vector<2x128xf32> to vector<2x32xf32>
    %93 = math.tanh %92 : vector<2x32xf32>
    %94 = vector.extract_strided_slice %91 {offsets = [0, 0], sizes = [2, 32], strides = [1, 1]} : vector<2x128xf32> to vector<2x32xf32>
    %95 = vector.extract_strided_slice %91 {offsets = [0, 32], sizes = [2, 32], strides = [1, 1]} : vector<2x128xf32> to vector<2x32xf32>
    %96 = vector.extract_strided_slice %91 {offsets = [0, 96], sizes = [2, 32], strides = [1, 1]} : vector<2x128xf32> to vector<2x32xf32>
    %97 = arith.mulf %95, %60 : vector<2x32xf32>
    %98 = arith.mulf %94, %93 : vector<2x32xf32>
    %99 = arith.addf %97, %98 : vector<2x32xf32>
    %100 = math.tanh %99 : vector<2x32xf32>
    %101 = arith.mulf %96, %100 : vector<2x32xf32>
    %102 = tpu.concatenate %101, %81 in 1 : vector<2x32xf32>, vector<2x32xf32> -> vector<2x64xf32>
    %cst_21 = arith.constant dense<0.000000e+00> : vector<2x128xf32>
    %103 = tpu.matmul %102, %1, %cst_21 {dimension_numbers = #tpu.dot_dimension_numbers<[1], [0], [0], [1], [0, 0, 1, 1], [], []>} : vector<2x64xf32>, vector<64x128xf32>, vector<2x128xf32> -> vector<2x128xf32>
    %104 = vector.broadcast %2 : vector<1x128xf32> to vector<2x128xf32>
    %105 = arith.addf %103, %104 : vector<2x128xf32>
    %106 = arith.negf %105 : vector<2x128xf32>
    %107 = math.exp %106 : vector<2x128xf32>
    %cst_22 = arith.constant 1.000000e+00 : f32
    %108 = vector.broadcast %cst_22 : f32 to vector<2x128xf32>
    %109 = arith.addf %108, %107 : vector<2x128xf32>
    %110 = arith.divf %108, %109 : vector<2x128xf32>
    %111 = vector.extract_strided_slice %105 {offsets = [0, 64], sizes = [2, 32], strides = [1, 1]} : vector<2x128xf32> to vector<2x32xf32>
    %112 = math.tanh %111 : vector<2x32xf32>
    %113 = vector.extract_strided_slice %110 {offsets = [0, 0], sizes = [2, 32], strides = [1, 1]} : vector<2x128xf32> to vector<2x32xf32>
    %114 = vector.extract_strided_slice %110 {offsets = [0, 32], sizes = [2, 32], strides = [1, 1]} : vector<2x128xf32> to vector<2x32xf32>
    %115 = vector.extract_strided_slice %110 {offsets = [0, 96], sizes = [2, 32], strides = [1, 1]} : vector<2x128xf32> to vector<2x32xf32>
    %116 = arith.mulf %114, %79 : vector<2x32xf32>
    %117 = arith.mulf %113, %112 : vector<2x32xf32>
    %118 = arith.addf %116, %117 : vector<2x32xf32>
    %119 = math.tanh %118 : vector<2x32xf32>
    %120 = arith.mulf %115, %119 : vector<2x32xf32>
    %c3_i32 = arith.constant 3 : i32
    %cst_23 = arith.constant dense<0.000000e+00> : vector<2x128xf32>
    %121 = tpu.matmul %101, %0, %cst_23 {dimension_numbers = #tpu.dot_dimension_numbers<[1], [0], [0], [1], [0, 0, 1, 1], [], []>} : vector<2x32xf32>, vector<32x128xf32>, vector<2x128xf32> -> vector<2x128xf32>
    %122 = arith.index_cast %c3_i32 : i32 to index
    %c0_24 = arith.constant 0 : index
    %c0_25 = arith.constant 0 : index
    %123 = vector.load %arg0[%122, %c0_24, %c0_25] : memref<8x2x128xf32, #tpu.memory_space<vmem>>, vector<1x2x128xf32>
    %124 = vector.shape_cast %123 : vector<1x2x128xf32> to vector<2x128xf32>
    %125 = arith.addf %121, %124 : vector<2x128xf32>
    %126 = arith.negf %125 : vector<2x128xf32>
    %127 = math.exp %126 : vector<2x128xf32>
    %cst_26 = arith.constant 1.000000e+00 : f32
    %128 = vector.broadcast %cst_26 : f32 to vector<2x128xf32>
    %129 = arith.addf %128, %127 : vector<2x128xf32>
    %130 = arith.divf %128, %129 : vector<2x128xf32>
    %131 = vector.extract_strided_slice %125 {offsets = [0, 64], sizes = [2, 32], strides = [1, 1]} : vector<2x128xf32> to vector<2x32xf32>
    %132 = math.tanh %131 : vector<2x32xf32>
    %133 = vector.extract_strided_slice %130 {offsets = [0, 0], sizes = [2, 32], strides = [1, 1]} : vector<2x128xf32> to vector<2x32xf32>
    %134 = vector.extract_strided_slice %130 {offsets = [0, 32], sizes = [2, 32], strides = [1, 1]} : vector<2x128xf32> to vector<2x32xf32>
    %135 = vector.extract_strided_slice %130 {offsets = [0, 96], sizes = [2, 32], strides = [1, 1]} : vector<2x128xf32> to vector<2x32xf32>
    %136 = arith.mulf %134, %99 : vector<2x32xf32>
    %137 = arith.mulf %133, %132 : vector<2x32xf32>
    %138 = arith.addf %136, %137 : vector<2x32xf32>
    %139 = math.tanh %138 : vector<2x32xf32>
    %140 = arith.mulf %135, %139 : vector<2x32xf32>
    %141 = tpu.concatenate %140, %120 in 1 : vector<2x32xf32>, vector<2x32xf32> -> vector<2x64xf32>
    %cst_27 = arith.constant dense<0.000000e+00> : vector<2x128xf32>
    %142 = tpu.matmul %141, %1, %cst_27 {dimension_numbers = #tpu.dot_dimension_numbers<[1], [0], [0], [1], [0, 0, 1, 1], [], []>} : vector<2x64xf32>, vector<64x128xf32>, vector<2x128xf32> -> vector<2x128xf32>
    %143 = vector.broadcast %2 : vector<1x128xf32> to vector<2x128xf32>
    %144 = arith.addf %142, %143 : vector<2x128xf32>
    %145 = arith.negf %144 : vector<2x128xf32>
    %146 = math.exp %145 : vector<2x128xf32>
    %cst_28 = arith.constant 1.000000e+00 : f32
    %147 = vector.broadcast %cst_28 : f32 to vector<2x128xf32>
    %148 = arith.addf %147, %146 : vector<2x128xf32>
    %149 = arith.divf %147, %148 : vector<2x128xf32>
    %150 = vector.extract_strided_slice %144 {offsets = [0, 64], sizes = [2, 32], strides = [1, 1]} : vector<2x128xf32> to vector<2x32xf32>
    %151 = math.tanh %150 : vector<2x32xf32>
    %152 = vector.extract_strided_slice %149 {offsets = [0, 0], sizes = [2, 32], strides = [1, 1]} : vector<2x128xf32> to vector<2x32xf32>
    %153 = vector.extract_strided_slice %149 {offsets = [0, 32], sizes = [2, 32], strides = [1, 1]} : vector<2x128xf32> to vector<2x32xf32>
    %154 = vector.extract_strided_slice %149 {offsets = [0, 96], sizes = [2, 32], strides = [1, 1]} : vector<2x128xf32> to vector<2x32xf32>
    %155 = arith.mulf %153, %118 : vector<2x32xf32>
    %156 = arith.mulf %152, %151 : vector<2x32xf32>
    %157 = arith.addf %155, %156 : vector<2x32xf32>
    %158 = math.tanh %157 : vector<2x32xf32>
    %159 = arith.mulf %154, %158 : vector<2x32xf32>
    %c4_i32 = arith.constant 4 : i32
    %cst_29 = arith.constant dense<0.000000e+00> : vector<2x128xf32>
    %160 = tpu.matmul %140, %0, %cst_29 {dimension_numbers = #tpu.dot_dimension_numbers<[1], [0], [0], [1], [0, 0, 1, 1], [], []>} : vector<2x32xf32>, vector<32x128xf32>, vector<2x128xf32> -> vector<2x128xf32>
    %161 = arith.index_cast %c4_i32 : i32 to index
    %c0_30 = arith.constant 0 : index
    %c0_31 = arith.constant 0 : index
    %162 = vector.load %arg0[%161, %c0_30, %c0_31] : memref<8x2x128xf32, #tpu.memory_space<vmem>>, vector<1x2x128xf32>
    %163 = vector.shape_cast %162 : vector<1x2x128xf32> to vector<2x128xf32>
    %164 = arith.addf %160, %163 : vector<2x128xf32>
    %165 = arith.negf %164 : vector<2x128xf32>
    %166 = math.exp %165 : vector<2x128xf32>
    %cst_32 = arith.constant 1.000000e+00 : f32
    %167 = vector.broadcast %cst_32 : f32 to vector<2x128xf32>
    %168 = arith.addf %167, %166 : vector<2x128xf32>
    %169 = arith.divf %167, %168 : vector<2x128xf32>
    %170 = vector.extract_strided_slice %164 {offsets = [0, 64], sizes = [2, 32], strides = [1, 1]} : vector<2x128xf32> to vector<2x32xf32>
    %171 = math.tanh %170 : vector<2x32xf32>
    %172 = vector.extract_strided_slice %169 {offsets = [0, 0], sizes = [2, 32], strides = [1, 1]} : vector<2x128xf32> to vector<2x32xf32>
    %173 = vector.extract_strided_slice %169 {offsets = [0, 32], sizes = [2, 32], strides = [1, 1]} : vector<2x128xf32> to vector<2x32xf32>
    %174 = vector.extract_strided_slice %169 {offsets = [0, 96], sizes = [2, 32], strides = [1, 1]} : vector<2x128xf32> to vector<2x32xf32>
    %175 = arith.mulf %173, %138 : vector<2x32xf32>
    %176 = arith.mulf %172, %171 : vector<2x32xf32>
    %177 = arith.addf %175, %176 : vector<2x32xf32>
    %178 = math.tanh %177 : vector<2x32xf32>
    %179 = arith.mulf %174, %178 : vector<2x32xf32>
    %180 = tpu.concatenate %179, %159 in 1 : vector<2x32xf32>, vector<2x32xf32> -> vector<2x64xf32>
    %cst_33 = arith.constant dense<0.000000e+00> : vector<2x128xf32>
    %181 = tpu.matmul %180, %1, %cst_33 {dimension_numbers = #tpu.dot_dimension_numbers<[1], [0], [0], [1], [0, 0, 1, 1], [], []>} : vector<2x64xf32>, vector<64x128xf32>, vector<2x128xf32> -> vector<2x128xf32>
    %182 = vector.broadcast %2 : vector<1x128xf32> to vector<2x128xf32>
    %183 = arith.addf %181, %182 : vector<2x128xf32>
    %184 = arith.negf %183 : vector<2x128xf32>
    %185 = math.exp %184 : vector<2x128xf32>
    %cst_34 = arith.constant 1.000000e+00 : f32
    %186 = vector.broadcast %cst_34 : f32 to vector<2x128xf32>
    %187 = arith.addf %186, %185 : vector<2x128xf32>
    %188 = arith.divf %186, %187 : vector<2x128xf32>
    %189 = vector.extract_strided_slice %183 {offsets = [0, 64], sizes = [2, 32], strides = [1, 1]} : vector<2x128xf32> to vector<2x32xf32>
    %190 = math.tanh %189 : vector<2x32xf32>
    %191 = vector.extract_strided_slice %188 {offsets = [0, 0], sizes = [2, 32], strides = [1, 1]} : vector<2x128xf32> to vector<2x32xf32>
    %192 = vector.extract_strided_slice %188 {offsets = [0, 32], sizes = [2, 32], strides = [1, 1]} : vector<2x128xf32> to vector<2x32xf32>
    %193 = vector.extract_strided_slice %188 {offsets = [0, 96], sizes = [2, 32], strides = [1, 1]} : vector<2x128xf32> to vector<2x32xf32>
    %194 = arith.mulf %192, %157 : vector<2x32xf32>
    %195 = arith.mulf %191, %190 : vector<2x32xf32>
    %196 = arith.addf %194, %195 : vector<2x32xf32>
    %197 = math.tanh %196 : vector<2x32xf32>
    %198 = arith.mulf %193, %197 : vector<2x32xf32>
    %c5_i32 = arith.constant 5 : i32
    %cst_35 = arith.constant dense<0.000000e+00> : vector<2x128xf32>
    %199 = tpu.matmul %179, %0, %cst_35 {dimension_numbers = #tpu.dot_dimension_numbers<[1], [0], [0], [1], [0, 0, 1, 1], [], []>} : vector<2x32xf32>, vector<32x128xf32>, vector<2x128xf32> -> vector<2x128xf32>
    %200 = arith.index_cast %c5_i32 : i32 to index
    %c0_36 = arith.constant 0 : index
    %c0_37 = arith.constant 0 : index
    %201 = vector.load %arg0[%200, %c0_36, %c0_37] : memref<8x2x128xf32, #tpu.memory_space<vmem>>, vector<1x2x128xf32>
    %202 = vector.shape_cast %201 : vector<1x2x128xf32> to vector<2x128xf32>
    %203 = arith.addf %199, %202 : vector<2x128xf32>
    %204 = arith.negf %203 : vector<2x128xf32>
    %205 = math.exp %204 : vector<2x128xf32>
    %cst_38 = arith.constant 1.000000e+00 : f32
    %206 = vector.broadcast %cst_38 : f32 to vector<2x128xf32>
    %207 = arith.addf %206, %205 : vector<2x128xf32>
    %208 = arith.divf %206, %207 : vector<2x128xf32>
    %209 = vector.extract_strided_slice %203 {offsets = [0, 64], sizes = [2, 32], strides = [1, 1]} : vector<2x128xf32> to vector<2x32xf32>
    %210 = math.tanh %209 : vector<2x32xf32>
    %211 = vector.extract_strided_slice %208 {offsets = [0, 0], sizes = [2, 32], strides = [1, 1]} : vector<2x128xf32> to vector<2x32xf32>
    %212 = vector.extract_strided_slice %208 {offsets = [0, 32], sizes = [2, 32], strides = [1, 1]} : vector<2x128xf32> to vector<2x32xf32>
    %213 = vector.extract_strided_slice %208 {offsets = [0, 96], sizes = [2, 32], strides = [1, 1]} : vector<2x128xf32> to vector<2x32xf32>
    %214 = arith.mulf %212, %177 : vector<2x32xf32>
    %215 = arith.mulf %211, %210 : vector<2x32xf32>
    %216 = arith.addf %214, %215 : vector<2x32xf32>
    %217 = math.tanh %216 : vector<2x32xf32>
    %218 = arith.mulf %213, %217 : vector<2x32xf32>
    %219 = tpu.concatenate %218, %198 in 1 : vector<2x32xf32>, vector<2x32xf32> -> vector<2x64xf32>
    %cst_39 = arith.constant dense<0.000000e+00> : vector<2x128xf32>
    %220 = tpu.matmul %219, %1, %cst_39 {dimension_numbers = #tpu.dot_dimension_numbers<[1], [0], [0], [1], [0, 0, 1, 1], [], []>} : vector<2x64xf32>, vector<64x128xf32>, vector<2x128xf32> -> vector<2x128xf32>
    %221 = vector.broadcast %2 : vector<1x128xf32> to vector<2x128xf32>
    %222 = arith.addf %220, %221 : vector<2x128xf32>
    %223 = arith.negf %222 : vector<2x128xf32>
    %224 = math.exp %223 : vector<2x128xf32>
    %cst_40 = arith.constant 1.000000e+00 : f32
    %225 = vector.broadcast %cst_40 : f32 to vector<2x128xf32>
    %226 = arith.addf %225, %224 : vector<2x128xf32>
    %227 = arith.divf %225, %226 : vector<2x128xf32>
    %228 = vector.extract_strided_slice %222 {offsets = [0, 64], sizes = [2, 32], strides = [1, 1]} : vector<2x128xf32> to vector<2x32xf32>
    %229 = math.tanh %228 : vector<2x32xf32>
    %230 = vector.extract_strided_slice %227 {offsets = [0, 0], sizes = [2, 32], strides = [1, 1]} : vector<2x128xf32> to vector<2x32xf32>
    %231 = vector.extract_strided_slice %227 {offsets = [0, 32], sizes = [2, 32], strides = [1, 1]} : vector<2x128xf32> to vector<2x32xf32>
    %232 = vector.extract_strided_slice %227 {offsets = [0, 96], sizes = [2, 32], strides = [1, 1]} : vector<2x128xf32> to vector<2x32xf32>
    %233 = arith.mulf %231, %196 : vector<2x32xf32>
    %234 = arith.mulf %230, %229 : vector<2x32xf32>
    %235 = arith.addf %233, %234 : vector<2x32xf32>
    %236 = math.tanh %235 : vector<2x32xf32>
    %237 = arith.mulf %232, %236 : vector<2x32xf32>
    %c6_i32 = arith.constant 6 : i32
    %cst_41 = arith.constant dense<0.000000e+00> : vector<2x128xf32>
    %238 = tpu.matmul %218, %0, %cst_41 {dimension_numbers = #tpu.dot_dimension_numbers<[1], [0], [0], [1], [0, 0, 1, 1], [], []>} : vector<2x32xf32>, vector<32x128xf32>, vector<2x128xf32> -> vector<2x128xf32>
    %239 = arith.index_cast %c6_i32 : i32 to index
    %c0_42 = arith.constant 0 : index
    %c0_43 = arith.constant 0 : index
    %240 = vector.load %arg0[%239, %c0_42, %c0_43] : memref<8x2x128xf32, #tpu.memory_space<vmem>>, vector<1x2x128xf32>
    %241 = vector.shape_cast %240 : vector<1x2x128xf32> to vector<2x128xf32>
    %242 = arith.addf %238, %241 : vector<2x128xf32>
    %243 = arith.negf %242 : vector<2x128xf32>
    %244 = math.exp %243 : vector<2x128xf32>
    %cst_44 = arith.constant 1.000000e+00 : f32
    %245 = vector.broadcast %cst_44 : f32 to vector<2x128xf32>
    %246 = arith.addf %245, %244 : vector<2x128xf32>
    %247 = arith.divf %245, %246 : vector<2x128xf32>
    %248 = vector.extract_strided_slice %242 {offsets = [0, 64], sizes = [2, 32], strides = [1, 1]} : vector<2x128xf32> to vector<2x32xf32>
    %249 = math.tanh %248 : vector<2x32xf32>
    %250 = vector.extract_strided_slice %247 {offsets = [0, 0], sizes = [2, 32], strides = [1, 1]} : vector<2x128xf32> to vector<2x32xf32>
    %251 = vector.extract_strided_slice %247 {offsets = [0, 32], sizes = [2, 32], strides = [1, 1]} : vector<2x128xf32> to vector<2x32xf32>
    %252 = vector.extract_strided_slice %247 {offsets = [0, 96], sizes = [2, 32], strides = [1, 1]} : vector<2x128xf32> to vector<2x32xf32>
    %253 = arith.mulf %251, %216 : vector<2x32xf32>
    %254 = arith.mulf %250, %249 : vector<2x32xf32>
    %255 = arith.addf %253, %254 : vector<2x32xf32>
    %256 = math.tanh %255 : vector<2x32xf32>
    %257 = arith.mulf %252, %256 : vector<2x32xf32>
    %258 = tpu.concatenate %257, %237 in 1 : vector<2x32xf32>, vector<2x32xf32> -> vector<2x64xf32>
    %cst_45 = arith.constant dense<0.000000e+00> : vector<2x128xf32>
    %259 = tpu.matmul %258, %1, %cst_45 {dimension_numbers = #tpu.dot_dimension_numbers<[1], [0], [0], [1], [0, 0, 1, 1], [], []>} : vector<2x64xf32>, vector<64x128xf32>, vector<2x128xf32> -> vector<2x128xf32>
    %260 = vector.broadcast %2 : vector<1x128xf32> to vector<2x128xf32>
    %261 = arith.addf %259, %260 : vector<2x128xf32>
    %262 = arith.negf %261 : vector<2x128xf32>
    %263 = math.exp %262 : vector<2x128xf32>
    %cst_46 = arith.constant 1.000000e+00 : f32
    %264 = vector.broadcast %cst_46 : f32 to vector<2x128xf32>
    %265 = arith.addf %264, %263 : vector<2x128xf32>
    %266 = arith.divf %264, %265 : vector<2x128xf32>
    %267 = vector.extract_strided_slice %261 {offsets = [0, 64], sizes = [2, 32], strides = [1, 1]} : vector<2x128xf32> to vector<2x32xf32>
    %268 = math.tanh %267 : vector<2x32xf32>
    %269 = vector.extract_strided_slice %266 {offsets = [0, 0], sizes = [2, 32], strides = [1, 1]} : vector<2x128xf32> to vector<2x32xf32>
    %270 = vector.extract_strided_slice %266 {offsets = [0, 32], sizes = [2, 32], strides = [1, 1]} : vector<2x128xf32> to vector<2x32xf32>
    %271 = vector.extract_strided_slice %266 {offsets = [0, 96], sizes = [2, 32], strides = [1, 1]} : vector<2x128xf32> to vector<2x32xf32>
    %272 = arith.mulf %270, %235 : vector<2x32xf32>
    %273 = arith.mulf %269, %268 : vector<2x32xf32>
    %274 = arith.addf %272, %273 : vector<2x32xf32>
    %275 = math.tanh %274 : vector<2x32xf32>
    %276 = arith.mulf %271, %275 : vector<2x32xf32>
    %c7_i32 = arith.constant 7 : i32
    %cst_47 = arith.constant dense<0.000000e+00> : vector<2x128xf32>
    %277 = tpu.matmul %257, %0, %cst_47 {dimension_numbers = #tpu.dot_dimension_numbers<[1], [0], [0], [1], [0, 0, 1, 1], [], []>} : vector<2x32xf32>, vector<32x128xf32>, vector<2x128xf32> -> vector<2x128xf32>
    %278 = arith.index_cast %c7_i32 : i32 to index
    %c0_48 = arith.constant 0 : index
    %c0_49 = arith.constant 0 : index
    %279 = vector.load %arg0[%278, %c0_48, %c0_49] : memref<8x2x128xf32, #tpu.memory_space<vmem>>, vector<1x2x128xf32>
    %280 = vector.shape_cast %279 : vector<1x2x128xf32> to vector<2x128xf32>
    %281 = arith.addf %277, %280 : vector<2x128xf32>
    %282 = arith.negf %281 : vector<2x128xf32>
    %283 = math.exp %282 : vector<2x128xf32>
    %cst_50 = arith.constant 1.000000e+00 : f32
    %284 = vector.broadcast %cst_50 : f32 to vector<2x128xf32>
    %285 = arith.addf %284, %283 : vector<2x128xf32>
    %286 = arith.divf %284, %285 : vector<2x128xf32>
    %287 = vector.extract_strided_slice %281 {offsets = [0, 64], sizes = [2, 32], strides = [1, 1]} : vector<2x128xf32> to vector<2x32xf32>
    %288 = math.tanh %287 : vector<2x32xf32>
    %289 = vector.extract_strided_slice %286 {offsets = [0, 0], sizes = [2, 32], strides = [1, 1]} : vector<2x128xf32> to vector<2x32xf32>
    %290 = vector.extract_strided_slice %286 {offsets = [0, 32], sizes = [2, 32], strides = [1, 1]} : vector<2x128xf32> to vector<2x32xf32>
    %291 = vector.extract_strided_slice %286 {offsets = [0, 96], sizes = [2, 32], strides = [1, 1]} : vector<2x128xf32> to vector<2x32xf32>
    %292 = arith.mulf %290, %255 : vector<2x32xf32>
    %293 = arith.mulf %289, %288 : vector<2x32xf32>
    %294 = arith.addf %292, %293 : vector<2x32xf32>
    %295 = math.tanh %294 : vector<2x32xf32>
    %296 = arith.mulf %291, %295 : vector<2x32xf32>
    %297 = tpu.concatenate %296, %276 in 1 : vector<2x32xf32>, vector<2x32xf32> -> vector<2x64xf32>
    %cst_51 = arith.constant dense<0.000000e+00> : vector<2x128xf32>
    %298 = tpu.matmul %297, %1, %cst_51 {dimension_numbers = #tpu.dot_dimension_numbers<[1], [0], [0], [1], [0, 0, 1, 1], [], []>} : vector<2x64xf32>, vector<64x128xf32>, vector<2x128xf32> -> vector<2x128xf32>
    %299 = vector.broadcast %2 : vector<1x128xf32> to vector<2x128xf32>
    %300 = arith.addf %298, %299 : vector<2x128xf32>
    %301 = arith.negf %300 : vector<2x128xf32>
    %302 = math.exp %301 : vector<2x128xf32>
    %cst_52 = arith.constant 1.000000e+00 : f32
    %303 = vector.broadcast %cst_52 : f32 to vector<2x128xf32>
    %304 = arith.addf %303, %302 : vector<2x128xf32>
    %305 = arith.divf %303, %304 : vector<2x128xf32>
    %306 = vector.extract_strided_slice %300 {offsets = [0, 64], sizes = [2, 32], strides = [1, 1]} : vector<2x128xf32> to vector<2x32xf32>
    %307 = math.tanh %306 : vector<2x32xf32>
    %308 = vector.extract_strided_slice %305 {offsets = [0, 0], sizes = [2, 32], strides = [1, 1]} : vector<2x128xf32> to vector<2x32xf32>
    %309 = vector.extract_strided_slice %305 {offsets = [0, 32], sizes = [2, 32], strides = [1, 1]} : vector<2x128xf32> to vector<2x32xf32>
    %310 = vector.extract_strided_slice %305 {offsets = [0, 96], sizes = [2, 32], strides = [1, 1]} : vector<2x128xf32> to vector<2x32xf32>
    %311 = arith.mulf %309, %274 : vector<2x32xf32>
    %312 = arith.mulf %308, %307 : vector<2x32xf32>
    %313 = arith.addf %311, %312 : vector<2x32xf32>
    %314 = math.tanh %313 : vector<2x32xf32>
    %315 = arith.mulf %310, %314 : vector<2x32xf32>
    %c8_i32 = arith.constant 8 : i32
    %cst_53 = arith.constant dense<0.000000e+00> : vector<2xf32>
    %316 = vector.multi_reduction <add>, %315, %cst_53 [1] : vector<2x32xf32> to vector<2xf32>
    %317 = vector.shape_cast %316 : vector<2xf32> to vector<2x1xf32>
    %cst_54 = arith.constant 3.200000e+01 : f32
    %318 = vector.broadcast %cst_54 : f32 to vector<2x1xf32>
    %319 = arith.divf %317, %318 : vector<2x1xf32>
    %320 = vector.broadcast %319 : vector<2x1xf32> to vector<2x32xf32>
    %321 = arith.subf %315, %320 : vector<2x32xf32>
    %322 = arith.mulf %321, %321 : vector<2x32xf32>
    %cst_55 = arith.constant dense<0.000000e+00> : vector<2xf32>
    %323 = vector.multi_reduction <add>, %322, %cst_55 [1] : vector<2x32xf32> to vector<2xf32>
    %324 = vector.shape_cast %323 : vector<2xf32> to vector<2x1xf32>
    %cst_56 = arith.constant 3.200000e+01 : f32
    %325 = vector.broadcast %cst_56 : f32 to vector<2x1xf32>
    %326 = arith.divf %324, %325 : vector<2x1xf32>
    %327 = vector.broadcast %319 : vector<2x1xf32> to vector<2x32xf32>
    %328 = arith.subf %315, %327 : vector<2x32xf32>
    %cst_57 = arith.constant 9.99999974E-6 : f32
    %329 = vector.broadcast %cst_57 : f32 to vector<2x1xf32>
    %330 = arith.addf %326, %329 : vector<2x1xf32>
    %331 = math.rsqrt %330 : vector<2x1xf32>
    %332 = vector.broadcast %331 : vector<2x1xf32> to vector<2x32xf32>
    %333 = arith.mulf %328, %332 : vector<2x32xf32>
    %c0_58 = arith.constant 0 : index
    %c0_59 = arith.constant 0 : index
    %334 = vector.load %arg4[%c0_58, %c0_59] : memref<1x32xf32, #tpu.memory_space<vmem>>, vector<1x32xf32>
    %335 = vector.broadcast %334 : vector<1x32xf32> to vector<2x32xf32>
    %336 = arith.mulf %333, %335 : vector<2x32xf32>
    %c0_60 = arith.constant 0 : index
    %c0_61 = arith.constant 0 : index
    %337 = vector.load %arg5[%c0_60, %c0_61] : memref<1x32xf32, #tpu.memory_space<vmem>>, vector<1x32xf32>
    %338 = vector.broadcast %337 : vector<1x32xf32> to vector<2x32xf32>
    %339 = arith.addf %336, %338 : vector<2x32xf32>
    %c0_62 = arith.constant 0 : index
    %c0_63 = arith.constant 0 : index
    %340 = vector.load %arg6[%c0_62, %c0_63] : memref<2x32xf32, #tpu.memory_space<vmem>>, vector<2x32xf32>
    tpu.vector_store %arg6[%c0_62, %c0_63], %339 {strides = array<i32>} : memref<2x32xf32, #tpu.memory_space<vmem>>, vector<2x32xf32>,
    return
  }
}

</mosaic_0001>

<llo_original>
// kernel: lstm_encoder_pallas.1
$region0: #{lstm_encoder_pallas.1}
  #allocation0 [shape = 'u32[]', space=smem, size = 0x4, offset = 0x4, fixed_abs, tag = 'smem constant byte address 0x4 - core index']
  #allocation1 [shape = 'u32[144,128]{1,0:T(1,128)}', space=vmem, size = 0x12000, scoped, tag = 'internal scratch']
  %s0 = inlined_call_operand.vmem [shape: f32[8,2,128], index: 0, kind: input, shape index: {}]
  %s1 = inlined_call_operand.vmem [shape: f32[32,128], index: 1, kind: input, shape index: {}]
  %s2 = inlined_call_operand.vmem [shape: f32[64,128], index: 2, kind: input, shape index: {}]
  %s3 = inlined_call_operand.vmem [shape: f32[1,128], index: 3, kind: input, shape index: {}]
  %s4 = inlined_call_operand.vmem [shape: f32[1,32], index: 4, kind: input, shape index: {}]
  %s5 = inlined_call_operand.vmem [shape: f32[1,32], index: 5, kind: input, shape index: {}]
  %s6 = inlined_call_operand.hbm [shape: f32[2,32], index: 6, kind: output, shape index: {}]
  %s7 = sld [smem:[#allocation0]]
  $region34: #{lstm_encoder_pallas.1} parent=0
    _
  %s9 = ssub.s32 1, %s7
  %s10 = scalar_select 0, %s9, %s7
  $region1: #{lstm_encoder_pallas.1} parent=0
    #allocation2 [shape = 'u8[1024]{0}', space=vmem, size = 0x400, scoped, tag = 'output window, operand 0, single buffered']
    #allocation3 [shape = 's32[1]{0}', space=sflag, size = 0x4, scoped, tag = 'scoped memory for lstm_encoder_pallas.1']
    %11 = vsyncpa [#allocation3], 0
    // Predicated region
    $region2: #{lstm_encoder_pallas.1} parent=1 // pred_check
      _
    $region3: #{lstm_encoder_pallas.1} parent=1 // pred_check_branch
      %13 = sbr.rel (0) target = $region5
    $region4: #{lstm_encoder_pallas.1} parent=1 // pred_region
      _
    $region5: #{lstm_encoder_pallas.1} parent=1 // pred_fallthru
      _
    // Predicated region
    $region6: #{lstm_encoder_pallas.1} parent=1 // pred_check
      _
    $region7: #{lstm_encoder_pallas.1} parent=1 // pred_check_branch
      %15 = sbr.rel (0) target = $region9
    $region8: #{lstm_encoder_pallas.1} parent=1 // pred_region
      _
    $region9: #{lstm_encoder_pallas.1} parent=1 // pred_fallthru
      _
    // Predicated region
    $region10: #{lstm_encoder_pallas.1} parent=1 // pred_check
      _
    $region11: #{lstm_encoder_pallas.1} parent=1 // pred_check_branch
      %17 = sbr.rel (0) target = $region13
    $region12: #{lstm_encoder_pallas.1} parent=1 // pred_region
      _
    $region13: #{lstm_encoder_pallas.1} parent=1 // pred_fallthru
      _
    // Predicated region
    $region14: #{lstm_encoder_pallas.1} parent=1 // pred_check
      _
    $region15: #{lstm_encoder_pallas.1} parent=1 // pred_check_branch
      %19 = sbr.rel (0) target = $region17
    $region16: #{lstm_encoder_pallas.1} parent=1 // pred_region
      _
    $region17: #{lstm_encoder_pallas.1} parent=1 // pred_fallthru
      _
    // Predicated region
    $region18: #{lstm_encoder_pallas.1} parent=1 // pred_check
      _
    $region19: #{lstm_encoder_pallas.1} parent=1 // pred_check_branch
      %21 = sbr.rel (0) target = $region21
    $region20: #{lstm_encoder_pallas.1} parent=1 // pred_region
      _
    $region21: #{lstm_encoder_pallas.1} parent=1 // pred_fallthru
      _
    // Predicated region
    $region22: #{lstm_encoder_pallas.1} parent=1 // pred_check
      _
    $region23: #{lstm_encoder_pallas.1} parent=1 // pred_check_branch
      %23 = sbr.rel (0) target = $region25
    $region24: #{lstm_encoder_pallas.1} parent=1 // pred_region
      _
    $region25: #{lstm_encoder_pallas.1} parent=1 // pred_fallthru
      _
    %v24 = vld [vmem:[%s1] sm:$0xff]
    %v25 = vld [vmem:[%s1 + $0x8] sm:$0xff]
    %v26 = vld [vmem:[%s1 + $0x10] sm:$0xff]
    %v27 = vld [vmem:[%s1 + $0x18] sm:$0xff]
    %v28 = vld [vmem:[%s2] sm:$0xff]
    %v29 = vld [vmem:[%s2 + $0x8] sm:$0xff]
    %v30 = vld [vmem:[%s2 + $0x10] sm:$0xff]
    %v31 = vld [vmem:[%s2 + $0x18] sm:$0xff]
    %v32 = vld [vmem:[%s2 + $0x20] sm:$0xff]
    %v33 = vld [vmem:[%s2 + $0x28] sm:$0xff]
    %v34 = vld [vmem:[%s2 + $0x30] sm:$0xff]
    %v35 = vld [vmem:[%s2 + $0x38] sm:$0xff]
    %v36 = vld [vmem:[%s3] sm:$0x1]
    %v37 = vld [vmem:[%s0] sm:$0x3]
    %vm38 = vcmask 261120
    %v40 = vsel %vm38, 0.0, 0
    %42 = vmatprep.subr.mxu0 0.0
    %43 = vmatpush1.msra.mxu0 %v24
    %44 = vmatprep.subr.mxu0 0.0
    %45 = vmatpush1.msra.mxu0 %v25
    %46 = vmatprep.subr.mxu0 0.0
    %47 = vmatpush1.msra.mxu0 %v26
    %48 = vmatprep.subr.mxu0 0.0
    %49 = vmatpush1.msra.mxu0 %v27
    %50 = vmatprep.subr.mxu0 0.0
    %51 = vmatpush1.msra.mxu0 0.0
    %52 = vmatprep.subr.mxu0 0.0
    %53 = vmatpush1.msra.mxu0 0.0
    %54 = vmatprep.subr.mxu0 0.0
    %55 = vmatpush1.msra.mxu0 0.0
    %56 = vmatprep.subr.mxu0 0.0
    %57 = vmatpush1.msra.mxu0 0.0
    %58 = vmatprep.subr.mxu0 0.0
    %59 = vmatpush1.msra.mxu0 0.0
    %60 = vmatprep.subr.mxu0 0.0
    %61 = vmatpush1.msra.mxu0 0.0
    %62 = vmatprep.subr.mxu0 0.0
    %63 = vmatpush1.msra.mxu0 0.0
    %64 = vmatprep.subr.mxu0 0.0
    %65 = vmatpush1.msra.mxu0 0.0
    %66 = vmatprep.subr.mxu0 0.0
    %67 = vmatpush1.msra.mxu0 0.0
    %68 = vmatprep.subr.mxu0 0.0
    %69 = vmatpush1.msra.mxu0 0.0
    %70 = vmatprep.subr.mxu0 0.0
    %71 = vmatpush1.msra.mxu0 0.0
    %72 = vmatprep.subr.mxu0 0.0
    %73 = vmatpush1.msra.mxu0 0.0
    %74 = vmatprep.subr.mxu0 0.0
    %75 = vmatpush1.msra.mxu0 0.0
    %76 = vmatprep.subr.mxu0 0.0
    %77 = vmatpush1.msra.mxu0 0.0
    %78 = vmatprep.subr.mxu0 0.0
    %79 = vmatpush1.msra.mxu0 0.0
    %80 = vmatprep.subr.mxu0 0.0
    %81 = vmatpush1.msra.mxu0 0.0
    %82 = vmatprep.subr.mxu0 0.0
    %83 = vmatpush1.msra.mxu0 0.0
    %84 = vmatprep.subr.mxu0 0.0
    %85 = vmatpush1.msra.mxu0 0.0
    %86 = vmatprep.subr.mxu0 0.0
    %87 = vmatpush1.msra.mxu0 0.0
    %88 = vmatprep.subr.mxu0 0.0
    %89 = vmatpush1.msra.mxu0 0.0
    %90 = vmatprep.subr.mxu0 0.0
    %91 = vmatpush1.msra.mxu0 0.0
    %92 = vmatprep.subr.mxu0 0.0
    %93 = vmatpush1.msra.mxu0 0.0
    %94 = vmatprep.subr.mxu0 0.0
    %95 = vmatpush1.msra.mxu0 0.0
    %96 = vmatprep.subr.mxu0 0.0
    %97 = vmatpush1.msra.mxu0 0.0
    %98 = vmatprep.subr.mxu0 0.0
    %99 = vmatpush1.msra.mxu0 0.0
    %100 = vmatprep.subr.mxu0 0.0
    %101 = vmatpush1.msra.mxu0 0.0
    %102 = vmatprep.subr.mxu0 0.0
    %103 = vmatpush1.msra.mxu0 0.0
    %104 = vmatprep.subr.mxu0 0.0
    %105 = vmatpush1.msra.mxu0 0.0
    %106 = vmatprep.mubr.f32.mxu0 0.0
    %107 = vmatmul.mubr.f32.gmra.mrb[0].mxu0 %v40
    %v108 = vpop.f32.mrb[0].mxu0
    %v109 = vadd.f32 %v37, %v108
    %v110 = vpop.f32.mrb[0].mxu0
    %111 = vdwg.mxu0
    %v112 = vxor.u32 %v109, 2147483648
    %v113 = vmul.f32 %v112, 1.442695
    %v114 = vpow.pop %v113
    %v115 = vadd.f32 %v114, 1.0
    %v116 = vrcp.pop %v115
    %v117 = vmul.f32 1.0, %v116
    %v118 = vtanh.pop %v109
    %v119 = vmul.f32 %v117, 0.0
    %121 = vrot.lane.b32.xlu0 %v118, 64
    %v122 = vpop.permute.xlu0 %121
    %v124 = vmul.f32 %v117, %v122
    %126 = vrot.lane.b32.xlu0 %v124, 32
    %v127 = vpop.permute.xlu0 %126
    %v129 = vadd.f32 %v119, %v127
    %v130 = vtanh.pop %v129
    %132 = vrot.lane.b32.xlu0 %v130, 64
    %v133 = vpop.permute.xlu0 %132
    %v135 = vmul.f32 %v117, %v133
    %137 = vrot.lane.b32.xlu0 %v135, 32
    %v138 = vpop.permute.xlu0 %137
    %v140 = vsel %vm38, %v138, 0.0
    %v142 = vlaneseq
    %v143 = vshrl.u32 %v142, 7
    %v144 = vsub.s32 0, %v143
    %v145 = vrot.slane %v36, %v144
    %vm147 = vcmask 523264
    %v149 = vsel %vm147, %v140, 0
    %151 = vmatprep.subr.mxu0 0.0
    %152 = vmatpush1.msra.mxu0 %v28
    %153 = vmatprep.subr.mxu0 0.0
    %154 = vmatpush1.msra.mxu0 %v29
    %155 = vmatprep.subr.mxu0 0.0
    %156 = vmatpush1.msra.mxu0 %v30
    %157 = vmatprep.subr.mxu0 0.0
    %158 = vmatpush1.msra.mxu0 %v31
    %159 = vmatprep.subr.mxu0 0.0
    %160 = vmatpush1.msra.mxu0 %v32
    %161 = vmatprep.subr.mxu0 0.0
    %162 = vmatpush1.msra.mxu0 %v33
    %163 = vmatprep.subr.mxu0 0.0
    %164 = vmatpush1.msra.mxu0 %v34
    %165 = vmatprep.subr.mxu0 0.0
    %166 = vmatpush1.msra.mxu0 %v35
    %167 = vmatprep.subr.mxu0 0.0
    %168 = vmatpush1.msra.mxu0 0.0
    %169 = vmatprep.subr.mxu0 0.0
    %170 = vmatpush1.msra.mxu0 0.0
    %171 = vmatprep.subr.mxu0 0.0
    %172 = vmatpush1.msra.mxu0 0.0
    %173 = vmatprep.subr.mxu0 0.0
    %174 = vmatpush1.msra.mxu0 0.0
    %175 = vmatprep.subr.mxu0 0.0
    %176 = vmatpush1.msra.mxu0 0.0
    %177 = vmatprep.subr.mxu0 0.0
    %178 = vmatpush1.msra.mxu0 0.0
    %179 = vmatprep.subr.mxu0 0.0
    %180 = vmatpush1.msra.mxu0 0.0
    %181 = vmatprep.subr.mxu0 0.0
    %182 = vmatpush1.msra.mxu0 0.0
    %183 = vmatprep.subr.mxu0 0.0
    %184 = vmatpush1.msra.mxu0 0.0
    %185 = vmatprep.subr.mxu0 0.0
    %186 = vmatpush1.msra.mxu0 0.0
    %187 = vmatprep.subr.mxu0 0.0
    %188 = vmatpush1.msra.mxu0 0.0
    %189 = vmatprep.subr.mxu0 0.0
    %190 = vmatpush1.msra.mxu0 0.0
    %191 = vmatprep.subr.mxu0 0.0
    %192 = vmatpush1.msra.mxu0 0.0
    %193 = vmatprep.subr.mxu0 0.0
    %194 = vmatpush1.msra.mxu0 0.0
    %195 = vmatprep.subr.mxu0 0.0
    %196 = vmatpush1.msra.mxu0 0.0
    %197 = vmatprep.subr.mxu0 0.0
    %198 = vmatpush1.msra.mxu0 0.0
    %199 = vmatprep.subr.mxu0 0.0
    %200 = vmatpush1.msra.mxu0 0.0
    %201 = vmatprep.subr.mxu0 0.0
    %202 = vmatpush1.msra.mxu0 0.0
    %203 = vmatprep.subr.mxu0 0.0
    %204 = vmatpush1.msra.mxu0 0.0
    %205 = vmatprep.subr.mxu0 0.0
    %206 = vmatpush1.msra.mxu0 0.0
    %207 = vmatprep.subr.mxu0 0.0
    %208 = vmatpush1.msra.mxu0 0.0
    %209 = vmatprep.subr.mxu0 0.0
    %210 = vmatpush1.msra.mxu0 0.0
    %211 = vmatprep.subr.mxu0 0.0
    %212 = vmatpush1.msra.mxu0 0.0
    %213 = vmatprep.subr.mxu0 0.0
    %214 = vmatpush1.msra.mxu0 0.0
    %215 = vmatprep.mubr.f32.mxu0 0.0
    %216 = vmatmul.mubr.f32.gmra.mrb[0].mxu0 %v149
    %v217 = vpop.f32.mrb[0].mxu0
    %v218 = vadd.f32 %v145, %v217
    %v219 = vpop.f32.mrb[0].mxu0
    %220 = vdwg.mxu0
    %v221 = vxor.u32 %v218, 2147483648
    %v222 = vmul.f32 %v221, 1.442695
    %v223 = vpow.pop %v222
    %v224 = vadd.f32 %v223, 1.0
    %v225 = vrcp.pop %v224
    %v226 = vmul.f32 1.0, %v225
    %v227 = vtanh.pop %v218
    %v228 = vmul.f32 %v226, 0.0
    %230 = vrot.lane.b32.xlu0 %v227, 64
    %v231 = vpop.permute.xlu0 %230
    %v233 = vmul.f32 %v226, %v231
    %235 = vrot.lane.b32.xlu0 %v233, 32
    %v236 = vpop.permute.xlu0 %235
    %v238 = vadd.f32 %v228, %v236
    %v239 = vtanh.pop %v238
    %241 = vrot.lane.b32.xlu0 %v239, 64
    %v242 = vpop.permute.xlu0 %241
    %v244 = vmul.f32 %v226, %v242
    %s245 = scalar_lea.vmem %s0, 2
    %v246 = vld [vmem:[%s245] sm:$0x3]
    %v247 = vsel %vm38, %v138, 0
    %249 = vmatprep.subr.mxu0 0.0
    %250 = vmatpush1.msra.mxu0 %v24
    %251 = vmatprep.subr.mxu0 0.0
    %252 = vmatpush1.msra.mxu0 %v25
    %253 = vmatprep.subr.mxu0 0.0
    %254 = vmatpush1.msra.mxu0 %v26
    %255 = vmatprep.subr.mxu0 0.0
    %256 = vmatpush1.msra.mxu0 %v27
    %257 = vmatprep.subr.mxu0 0.0
    %258 = vmatpush1.msra.mxu0 0.0
    %259 = vmatprep.subr.mxu0 0.0
    %260 = vmatpush1.msra.mxu0 0.0
    %261 = vmatprep.subr.mxu0 0.0
    %262 = vmatpush1.msra.mxu0 0.0
    %263 = vmatprep.subr.mxu0 0.0
    %264 = vmatpush1.msra.mxu0 0.0
    %265 = vmatprep.subr.mxu0 0.0
    %266 = vmatpush1.msra.mxu0 0.0
    %267 = vmatprep.subr.mxu0 0.0
    %268 = vmatpush1.msra.mxu0 0.0
    %269 = vmatprep.subr.mxu0 0.0
    %270 = vmatpush1.msra.mxu0 0.0
    %271 = vmatprep.subr.mxu0 0.0
    %272 = vmatpush1.msra.mxu0 0.0
    %273 = vmatprep.subr.mxu0 0.0
    %274 = vmatpush1.msra.mxu0 0.0
    %275 = vmatprep.subr.mxu0 0.0
    %276 = vmatpush1.msra.mxu0 0.0
    %277 = vmatprep.subr.mxu0 0.0
    %278 = vmatpush1.msra.mxu0 0.0
    %279 = vmatprep.subr.mxu0 0.0
    %280 = vmatpush1.msra.mxu0 0.0
    %281 = vmatprep.subr.mxu0 0.0
    %282 = vmatpush1.msra.mxu0 0.0
    %283 = vmatprep.subr.mxu0 0.0
    %284 = vmatpush1.msra.mxu0 0.0
    %285 = vmatprep.subr.mxu0 0.0
    %286 = vmatpush1.msra.mxu0 0.0
    %287 = vmatprep.subr.mxu0 0.0
    %288 = vmatpush1.msra.mxu0 0.0
    %289 = vmatprep.subr.mxu0 0.0
    %290 = vmatpush1.msra.mxu0 0.0
    %291 = vmatprep.subr.mxu0 0.0
    %292 = vmatpush1.msra.mxu0 0.0
    %293 = vmatprep.subr.mxu0 0.0
    %294 = vmatpush1.msra.mxu0 0.0
    %295 = vmatprep.subr.mxu0 0.0
    %296 = vmatpush1.msra.mxu0 0.0
    %297 = vmatprep.subr.mxu0 0.0
    %298 = vmatpush1.msra.mxu0 0.0
    %299 = vmatprep.subr.mxu0 0.0
    %300 = vmatpush1.msra.mxu0 0.0
    %301 = vmatprep.subr.mxu0 0.0
    %302 = vmatpush1.msra.mxu0 0.0
    %303 = vmatprep.subr.mxu0 0.0
    %304 = vmatpush1.msra.mxu0 0.0
    %305 = vmatprep.subr.mxu0 0.0
    %306 = vmatpush1.msra.mxu0 0.0
    %307 = vmatprep.subr.mxu0 0.0
    %308 = vmatpush1.msra.mxu0 0.0
    %309 = vmatprep.subr.mxu0 0.0
    %310 = vmatpush1.msra.mxu0 0.0
    %311 = vmatprep.subr.mxu0 0.0
    %312 = vmatpush1.msra.mxu0 0.0
    %313 = vmatprep.mubr.f32.mxu0 0.0
    %314 = vmatmul.mubr.f32.gmra.mrb[0].mxu0 %v247
    %v315 = vpop.f32.mrb[0].mxu0
    %v316 = vadd.f32 %v246, %v315
    %v317 = vpop.f32.mrb[0].mxu0
    %318 = vdwg.mxu0
    %v319 = vxor.u32 %v316, 2147483648
    %v320 = vmul.f32 %v319, 1.442695
    %v321 = vpow.pop %v320
    %v322 = vadd.f32 %v321, 1.0
    %v323 = vrcp.pop %v322
    %v324 = vmul.f32 1.0, %v323
    %v325 = vtanh.pop %v316
    %v326 = vmul.f32 %v324, %v129
    %328 = vrot.lane.b32.xlu0 %v325, 64
    %v329 = vpop.permute.xlu0 %328
    %v331 = vmul.f32 %v324, %v329
    %333 = vrot.lane.b32.xlu0 %v331, 32
    %v334 = vpop.permute.xlu0 %333
    %v336 = vadd.f32 %v326, %v334
    %v337 = vtanh.pop %v336
    %339 = vrot.lane.b32.xlu0 %v337, 64
    %v340 = vpop.permute.xlu0 %339
    %v342 = vmul.f32 %v324, %v340
    %344 = vrot.lane.b32.xlu0 %v342, 32
    %v345 = vpop.permute.xlu0 %344
    %348 = vrot.lane.b32.xlu0 %v244, 64
    %v349 = vpop.permute.xlu0 %348
    %v351 = vsel %vm38, %v345, %v349
    %v353 = vsel %vm147, %v351, 0
    %355 = vmatprep.subr.mxu0 0.0
    %356 = vmatpush1.msra.mxu0 %v28
    %357 = vmatprep.subr.mxu0 0.0
    %358 = vmatpush1.msra.mxu0 %v29
    %359 = vmatprep.subr.mxu0 0.0
    %360 = vmatpush1.msra.mxu0 %v30
    %361 = vmatprep.subr.mxu0 0.0
    %362 = vmatpush1.msra.mxu0 %v31
    %363 = vmatprep.subr.mxu0 0.0
    %364 = vmatpush1.msra.mxu0 %v32
    %365 = vmatprep.subr.mxu0 0.0
    %366 = vmatpush1.msra.mxu0 %v33
    %367 = vmatprep.subr.mxu0 0.0
    %368 = vmatpush1.msra.mxu0 %v34
    %369 = vmatprep.subr.mxu0 0.0
    %370 = vmatpush1.msra.mxu0 %v35
    %371 = vmatprep.subr.mxu0 0.0
    %372 = vmatpush1.msra.mxu0 0.0
    %373 = vmatprep.subr.mxu0 0.0
    %374 = vmatpush1.msra.mxu0 0.0
    %375 = vmatprep.subr.mxu0 0.0
    %376 = vmatpush1.msra.mxu0 0.0
    %377 = vmatprep.subr.mxu0 0.0
    %378 = vmatpush1.msra.mxu0 0.0
    %379 = vmatprep.subr.mxu0 0.0
    %380 = vmatpush1.msra.mxu0 0.0
    %381 = vmatprep.subr.mxu0 0.0
    %382 = vmatpush1.msra.mxu0 0.0
    %383 = vmatprep.subr.mxu0 0.0
    %384 = vmatpush1.msra.mxu0 0.0
    %385 = vmatprep.subr.mxu0 0.0
    %386 = vmatpush1.msra.mxu0 0.0
    %387 = vmatprep.subr.mxu0 0.0
    %388 = vmatpush1.msra.mxu0 0.0
    %389 = vmatprep.subr.mxu0 0.0
    %390 = vmatpush1.msra.mxu0 0.0
    %391 = vmatprep.subr.mxu0 0.0
    %392 = vmatpush1.msra.mxu0 0.0
    %393 = vmatprep.subr.mxu0 0.0
    %394 = vmatpush1.msra.mxu0 0.0
    %395 = vmatprep.subr.mxu0 0.0
    %396 = vmatpush1.msra.mxu0 0.0
    %397 = vmatprep.subr.mxu0 0.0
    %398 = vmatpush1.msra.mxu0 0.0
    %399 = vmatprep.subr.mxu0 0.0
    %400 = vmatpush1.msra.mxu0 0.0
    %401 = vmatprep.subr.mxu0 0.0
    %402 = vmatpush1.msra.mxu0 0.0
    %403 = vmatprep.subr.mxu0 0.0
    %404 = vmatpush1.msra.mxu0 0.0
    %405 = vmatprep.subr.mxu0 0.0
    %406 = vmatpush1.msra.mxu0 0.0
    %407 = vmatprep.subr.mxu0 0.0
    %408 = vmatpush1.msra.mxu0 0.0
    %409 = vmatprep.subr.mxu0 0.0
    %410 = vmatpush1.msra.mxu0 0.0
    %411 = vmatprep.subr.mxu0 0.0
    %412 = vmatpush1.msra.mxu0 0.0
    %413 = vmatprep.subr.mxu0 0.0
    %414 = vmatpush1.msra.mxu0 0.0
    %415 = vmatprep.subr.mxu0 0.0
    %416 = vmatpush1.msra.mxu0 0.0
    %417 = vmatprep.subr.mxu0 0.0
    %418 = vmatpush1.msra.mxu0 0.0
    %419 = vmatprep.mubr.f32.mxu0 0.0
    %420 = vmatmul.mubr.f32.gmra.mrb[0].mxu0 %v353
    %v421 = vpop.f32.mrb[0].mxu0
    %v422 = vadd.f32 %v145, %v421
    %v423 = vpop.f32.mrb[0].mxu0
    %424 = vdwg.mxu0
    %v425 = vxor.u32 %v422, 2147483648
    %v426 = vmul.f32 %v425, 1.442695
    %v427 = vpow.pop %v426
    %v428 = vadd.f32 %v427, 1.0
    %v429 = vrcp.pop %v428
    %v430 = vmul.f32 1.0, %v429
    %v431 = vtanh.pop %v422
    %v432 = vmul.f32 %v430, %v238
    %434 = vrot.lane.b32.xlu0 %v431, 64
    %v435 = vpop.permute.xlu0 %434
    %v437 = vmul.f32 %v430, %v435
    %439 = vrot.lane.b32.xlu0 %v437, 32
    %v440 = vpop.permute.xlu0 %439
    %v442 = vadd.f32 %v432, %v440
    %v443 = vtanh.pop %v442
    %445 = vrot.lane.b32.xlu0 %v443, 64
    %v446 = vpop.permute.xlu0 %445
    %v448 = vmul.f32 %v430, %v446
    %s449 = scalar_lea.vmem %s0, 4
    %v450 = vld [vmem:[%s449] sm:$0x3]
    %v451 = vsel %vm38, %v345, 0
    %453 = vmatprep.subr.mxu0 0.0
    %454 = vmatpush1.msra.mxu0 %v24
    %455 = vmatprep.subr.mxu0 0.0
    %456 = vmatpush1.msra.mxu0 %v25
    %457 = vmatprep.subr.mxu0 0.0
    %458 = vmatpush1.msra.mxu0 %v26
    %459 = vmatprep.subr.mxu0 0.0
    %460 = vmatpush1.msra.mxu0 %v27
    %461 = vmatprep.subr.mxu0 0.0
    %462 = vmatpush1.msra.mxu0 0.0
    %463 = vmatprep.subr.mxu0 0.0
    %464 = vmatpush1.msra.mxu0 0.0
    %465 = vmatprep.subr.mxu0 0.0
    %466 = vmatpush1.msra.mxu0 0.0
    %467 = vmatprep.subr.mxu0 0.0
    %468 = vmatpush1.msra.mxu0 0.0
    %469 = vmatprep.subr.mxu0 0.0
    %470 = vmatpush1.msra.mxu0 0.0
    %471 = vmatprep.subr.mxu0 0.0
    %472 = vmatpush1.msra.mxu0 0.0
    %473 = vmatprep.subr.mxu0 0.0
    %474 = vmatpush1.msra.mxu0 0.0
    %475 = vmatprep.subr.mxu0 0.0
    %476 = vmatpush1.msra.mxu0 0.0
    %477 = vmatprep.subr.mxu0 0.0
    %478 = vmatpush1.msra.mxu0 0.0
    %479 = vmatprep.subr.mxu0 0.0
    %480 = vmatpush1.msra.mxu0 0.0
    %481 = vmatprep.subr.mxu0 0.0
    %482 = vmatpush1.msra.mxu0 0.0
    %483 = vmatprep.subr.mxu0 0.0
    %484 = vmatpush1.msra.mxu0 0.0
    %485 = vmatprep.subr.mxu0 0.0
    %486 = vmatpush1.msra.mxu0 0.0
    %487 = vmatprep.subr.mxu0 0.0
    %488 = vmatpush1.msra.mxu0 0.0
    %489 = vmatprep.subr.mxu0 0.0
    %490 = vmatpush1.msra.mxu0 0.0
    %491 = vmatprep.subr.mxu0 0.0
    %492 = vmatpush1.msra.mxu0 0.0
    %493 = vmatprep.subr.mxu0 0.0
    %494 = vmatpush1.msra.mxu0 0.0
    %495 = vmatprep.subr.mxu0 0.0
    %496 = vmatpush1.msra.mxu0 0.0
    %497 = vmatprep.subr.mxu0 0.0
    %498 = vmatpush1.msra.mxu0 0.0
    %499 = vmatprep.subr.mxu0 0.0
    %500 = vmatpush1.msra.mxu0 0.0
    %501 = vmatprep.subr.mxu0 0.0
    %502 = vmatpush1.msra.mxu0 0.0
    %503 = vmatprep.subr.mxu0 0.0
    %504 = vmatpush1.msra.mxu0 0.0
    %505 = vmatprep.subr.mxu0 0.0
    %506 = vmatpush1.msra.mxu0 0.0
    %507 = vmatprep.subr.mxu0 0.0
    %508 = vmatpush1.msra.mxu0 0.0
    %509 = vmatprep.subr.mxu0 0.0
    %510 = vmatpush1.msra.mxu0 0.0
    %511 = vmatprep.subr.mxu0 0.0
    %512 = vmatpush1.msra.mxu0 0.0
    %513 = vmatprep.subr.mxu0 0.0
    %514 = vmatpush1.msra.mxu0 0.0
    %515 = vmatprep.subr.mxu0 0.0
    %516 = vmatpush1.msra.mxu0 0.0
    %517 = vmatprep.mubr.f32.mxu0 0.0
    %518 = vmatmul.mubr.f32.gmra.mrb[0].mxu0 %v451
    %v519 = vpop.f32.mrb[0].mxu0
    %v520 = vadd.f32 %v450, %v519
    %v521 = vpop.f32.mrb[0].mxu0
    %522 = vdwg.mxu0
    %v523 = vxor.u32 %v520, 2147483648
    %v524 = vmul.f32 %v523, 1.442695
    %v525 = vpow.pop %v524
    %v526 = vadd.f32 %v525, 1.0
    %v527 = vrcp.pop %v526
    %v528 = vmul.f32 1.0, %v527
    %v529 = vtanh.pop %v520
    %v530 = vmul.f32 %v528, %v336
    %532 = vrot.lane.b32.xlu0 %v529, 64
    %v533 = vpop.permute.xlu0 %532
    %v535 = vmul.f32 %v528, %v533
    %537 = vrot.lane.b32.xlu0 %v535, 32
    %v538 = vpop.permute.xlu0 %537
    %v540 = vadd.f32 %v530, %v538
    %v541 = vtanh.pop %v540
    %543 = vrot.lane.b32.xlu0 %v541, 64
    %v544 = vpop.permute.xlu0 %543
    %v546 = vmul.f32 %v528, %v544
    %548 = vrot.lane.b32.xlu0 %v546, 32
    %v549 = vpop.permute.xlu0 %548
    %552 = vrot.lane.b32.xlu0 %v448, 64
    %v553 = vpop.permute.xlu0 %552
    %v555 = vsel %vm38, %v549, %v553
    %v557 = vsel %vm147, %v555, 0
    %559 = vmatprep.subr.mxu0 0.0
    %560 = vmatpush1.msra.mxu0 %v28
    %561 = vmatprep.subr.mxu0 0.0
    %562 = vmatpush1.msra.mxu0 %v29
    %563 = vmatprep.subr.mxu0 0.0
    %564 = vmatpush1.msra.mxu0 %v30
    %565 = vmatprep.subr.mxu0 0.0
    %566 = vmatpush1.msra.mxu0 %v31
    %567 = vmatprep.subr.mxu0 0.0
    %568 = vmatpush1.msra.mxu0 %v32
    %569 = vmatprep.subr.mxu0 0.0
    %570 = vmatpush1.msra.mxu0 %v33
    %571 = vmatprep.subr.mxu0 0.0
    %572 = vmatpush1.msra.mxu0 %v34
    %573 = vmatprep.subr.mxu0 0.0
    %574 = vmatpush1.msra.mxu0 %v35
    %575 = vmatprep.subr.mxu0 0.0
    %576 = vmatpush1.msra.mxu0 0.0
    %577 = vmatprep.subr.mxu0 0.0
    %578 = vmatpush1.msra.mxu0 0.0
    %579 = vmatprep.subr.mxu0 0.0
    %580 = vmatpush1.msra.mxu0 0.0
    %581 = vmatprep.subr.mxu0 0.0
    %582 = vmatpush1.msra.mxu0 0.0
    %583 = vmatprep.subr.mxu0 0.0
    %584 = vmatpush1.msra.mxu0 0.0
    %585 = vmatprep.subr.mxu0 0.0
    %586 = vmatpush1.msra.mxu0 0.0
    %587 = vmatprep.subr.mxu0 0.0
    %588 = vmatpush1.msra.mxu0 0.0
    %589 = vmatprep.subr.mxu0 0.0
    %590 = vmatpush1.msra.mxu0 0.0
    %591 = vmatprep.subr.mxu0 0.0
    %592 = vmatpush1.msra.mxu0 0.0
    %593 = vmatprep.subr.mxu0 0.0
    %594 = vmatpush1.msra.mxu0 0.0
    %595 = vmatprep.subr.mxu0 0.0
    %596 = vmatpush1.msra.mxu0 0.0
    %597 = vmatprep.subr.mxu0 0.0
    %598 = vmatpush1.msra.mxu0 0.0
    %599 = vmatprep.subr.mxu0 0.0
    %600 = vmatpush1.msra.mxu0 0.0
    %601 = vmatprep.subr.mxu0 0.0
    %602 = vmatpush1.msra.mxu0 0.0
    %603 = vmatprep.subr.mxu0 0.0
    %604 = vmatpush1.msra.mxu0 0.0
    %605 = vmatprep.subr.mxu0 0.0
    %606 = vmatpush1.msra.mxu0 0.0
    %607 = vmatprep.subr.mxu0 0.0
    %608 = vmatpush1.msra.mxu0 0.0
    %609 = vmatprep.subr.mxu0 0.0
    %610 = vmatpush1.msra.mxu0 0.0
    %611 = vmatprep.subr.mxu0 0.0
    %612 = vmatpush1.msra.mxu0 0.0
    %613 = vmatprep.subr.mxu0 0.0
    %614 = vmatpush1.msra.mxu0 0.0
    %615 = vmatprep.subr.mxu0 0.0
    %616 = vmatpush1.msra.mxu0 0.0
    %617 = vmatprep.subr.mxu0 0.0
    %618 = vmatpush1.msra.mxu0 0.0
    %619 = vmatprep.subr.mxu0 0.0
    %620 = vmatpush1.msra.mxu0 0.0
    %621 = vmatprep.subr.mxu0 0.0
    %622 = vmatpush1.msra.mxu0 0.0
    %623 = vmatprep.mubr.f32.mxu0 0.0
    %624 = vmatmul.mubr.f32.gmra.mrb[0].mxu0 %v557
    %v625 = vpop.f32.mrb[0].mxu0
    %v626 = vadd.f32 %v145, %v625
    %v627 = vpop.f32.mrb[0].mxu0
    %628 = vdwg.mxu0
    %v629 = vxor.u32 %v626, 2147483648
    %v630 = vmul.f32 %v629, 1.442695
    %v631 = vpow.pop %v630
    %v632 = vadd.f32 %v631, 1.0
    %v633 = vrcp.pop %v632
    %v634 = vmul.f32 1.0, %v633
    %v635 = vtanh.pop %v626
    %v636 = vmul.f32 %v634, %v442
    %638 = vrot.lane.b32.xlu0 %v635, 64
    %v639 = vpop.permute.xlu0 %638
    %v641 = vmul.f32 %v634, %v639
    %643 = vrot.lane.b32.xlu0 %v641, 32
    %v644 = vpop.permute.xlu0 %643
    %v646 = vadd.f32 %v636, %v644
    %v647 = vtanh.pop %v646
    %649 = vrot.lane.b32.xlu0 %v647, 64
    %v650 = vpop.permute.xlu0 %649
    %v652 = vmul.f32 %v634, %v650
    %s653 = scalar_lea.vmem %s0, 6
    %v654 = vld [vmem:[%s653] sm:$0x3]
    %v655 = vsel %vm38, %v549, 0
    %657 = vmatprep.subr.mxu0 0.0
    %658 = vmatpush1.msra.mxu0 %v24
    %659 = vmatprep.subr.mxu0 0.0
    %660 = vmatpush1.msra.mxu0 %v25
    %661 = vmatprep.subr.mxu0 0.0
    %662 = vmatpush1.msra.mxu0 %v26
    %663 = vmatprep.subr.mxu0 0.0
    %664 = vmatpush1.msra.mxu0 %v27
    %665 = vmatprep.subr.mxu0 0.0
    %666 = vmatpush1.msra.mxu0 0.0
    %667 = vmatprep.subr.mxu0 0.0
    %668 = vmatpush1.msra.mxu0 0.0
    %669 = vmatprep.subr.mxu0 0.0
    %670 = vmatpush1.msra.mxu0 0.0
    %671 = vmatprep.subr.mxu0 0.0
    %672 = vmatpush1.msra.mxu0 0.0
    %673 = vmatprep.subr.mxu0 0.0
    %674 = vmatpush1.msra.mxu0 0.0
    %675 = vmatprep.subr.mxu0 0.0
    %676 = vmatpush1.msra.mxu0 0.0
    %677 = vmatprep.subr.mxu0 0.0
    %678 = vmatpush1.msra.mxu0 0.0
    %679 = vmatprep.subr.mxu0 0.0
    %680 = vmatpush1.msra.mxu0 0.0
    %681 = vmatprep.subr.mxu0 0.0
    %682 = vmatpush1.msra.mxu0 0.0
    %683 = vmatprep.subr.mxu0 0.0
    %684 = vmatpush1.msra.mxu0 0.0
    %685 = vmatprep.subr.mxu0 0.0
    %686 = vmatpush1.msra.mxu0 0.0
    %687 = vmatprep.subr.mxu0 0.0
    %688 = vmatpush1.msra.mxu0 0.0
    %689 = vmatprep.subr.mxu0 0.0
    %690 = vmatpush1.msra.mxu0 0.0
    %691 = vmatprep.subr.mxu0 0.0
    %692 = vmatpush1.msra.mxu0 0.0
    %693 = vmatprep.subr.mxu0 0.0
    %694 = vmatpush1.msra.mxu0 0.0
    %695 = vmatprep.subr.mxu0 0.0
    %696 = vmatpush1.msra.mxu0 0.0
    %697 = vmatprep.subr.mxu0 0.0
    %698 = vmatpush1.msra.mxu0 0.0
    %699 = vmatprep.subr.mxu0 0.0
    %700 = vmatpush1.msra.mxu0 0.0
    %701 = vmatprep.subr.mxu0 0.0
    %702 = vmatpush1.msra.mxu0 0.0
    %703 = vmatprep.subr.mxu0 0.0
    %704 = vmatpush1.msra.mxu0 0.0
    %705 = vmatprep.subr.mxu0 0.0
    %706 = vmatpush1.msra.mxu0 0.0
    %707 = vmatprep.subr.mxu0 0.0
    %708 = vmatpush1.msra.mxu0 0.0
    %709 = vmatprep.subr.mxu0 0.0
    %710 = vmatpush1.msra.mxu0 0.0
    %711 = vmatprep.subr.mxu0 0.0
    %712 = vmatpush1.msra.mxu0 0.0
    %713 = vmatprep.subr.mxu0 0.0
    %714 = vmatpush1.msra.mxu0 0.0
    %715 = vmatprep.subr.mxu0 0.0
    %716 = vmatpush1.msra.mxu0 0.0
    %717 = vmatprep.subr.mxu0 0.0
    %718 = vmatpush1.msra.mxu0 0.0
    %719 = vmatprep.subr.mxu0 0.0
    %720 = vmatpush1.msra.mxu0 0.0
    %721 = vmatprep.mubr.f32.mxu0 0.0
    %722 = vmatmul.mubr.f32.gmra.mrb[0].mxu0 %v655
    %v723 = vpop.f32.mrb[0].mxu0
    %v724 = vadd.f32 %v654, %v723
    %v725 = vpop.f32.mrb[0].mxu0
    %726 = vdwg.mxu0
    %v727 = vxor.u32 %v724, 2147483648
    %v728 = vmul.f32 %v727, 1.442695
    %v729 = vpow.pop %v728
    %v730 = vadd.f32 %v729, 1.0
    %v731 = vrcp.pop %v730
    %v732 = vmul.f32 1.0, %v731
    %v733 = vtanh.pop %v724
    %v734 = vmul.f32 %v732, %v540
    %736 = vrot.lane.b32.xlu0 %v733, 64
    %v737 = vpop.permute.xlu0 %736
    %v739 = vmul.f32 %v732, %v737
    %741 = vrot.lane.b32.xlu0 %v739, 32
    %v742 = vpop.permute.xlu0 %741
    %v744 = vadd.f32 %v734, %v742
    %v745 = vtanh.pop %v744
    %747 = vrot.lane.b32.xlu0 %v745, 64
    %v748 = vpop.permute.xlu0 %747
    %v750 = vmul.f32 %v732, %v748
    %752 = vrot.lane.b32.xlu0 %v750, 32
    %v753 = vpop.permute.xlu0 %752
    %756 = vrot.lane.b32.xlu0 %v652, 64
    %v757 = vpop.permute.xlu0 %756
    %v759 = vsel %vm38, %v753, %v757
    %v761 = vsel %vm147, %v759, 0
    %763 = vmatprep.subr.mxu0 0.0
    %764 = vmatpush1.msra.mxu0 %v28
    %765 = vmatprep.subr.mxu0 0.0
    %766 = vmatpush1.msra.mxu0 %v29
    %767 = vmatprep.subr.mxu0 0.0
    %768 = vmatpush1.msra.mxu0 %v30
    %769 = vmatprep.subr.mxu0 0.0
    %770 = vmatpush1.msra.mxu0 %v31
    %771 = vmatprep.subr.mxu0 0.0
    %772 = vmatpush1.msra.mxu0 %v32
    %773 = vmatprep.subr.mxu0 0.0
    %774 = vmatpush1.msra.mxu0 %v33
    %775 = vmatprep.subr.mxu0 0.0
    %776 = vmatpush1.msra.mxu0 %v34
    %777 = vmatprep.subr.mxu0 0.0
    %778 = vmatpush1.msra.mxu0 %v35
    %779 = vmatprep.subr.mxu0 0.0
    %780 = vmatpush1.msra.mxu0 0.0
    %781 = vmatprep.subr.mxu0 0.0
    %782 = vmatpush1.msra.mxu0 0.0
    %783 = vmatprep.subr.mxu0 0.0
    %784 = vmatpush1.msra.mxu0 0.0
    %785 = vmatprep.subr.mxu0 0.0
    %786 = vmatpush1.msra.mxu0 0.0
    %787 = vmatprep.subr.mxu0 0.0
    %788 = vmatpush1.msra.mxu0 0.0
    %789 = vmatprep.subr.mxu0 0.0
    %790 = vmatpush1.msra.mxu0 0.0
    %791 = vmatprep.subr.mxu0 0.0
    %792 = vmatpush1.msra.mxu0 0.0
    %793 = vmatprep.subr.mxu0 0.0
    %794 = vmatpush1.msra.mxu0 0.0
    %795 = vmatprep.subr.mxu0 0.0
    %796 = vmatpush1.msra.mxu0 0.0
    %797 = vmatprep.subr.mxu0 0.0
    %798 = vmatpush1.msra.mxu0 0.0
    %799 = vmatprep.subr.mxu0 0.0
    %800 = vmatpush1.msra.mxu0 0.0
    %801 = vmatprep.subr.mxu0 0.0
    %802 = vmatpush1.msra.mxu0 0.0
    %803 = vmatprep.subr.mxu0 0.0
    %804 = vmatpush1.msra.mxu0 0.0
    %805 = vmatprep.subr.mxu0 0.0
    %806 = vmatpush1.msra.mxu0 0.0
    %807 = vmatprep.subr.mxu0 0.0
    %808 = vmatpush1.msra.mxu0 0.0
    %809 = vmatprep.subr.mxu0 0.0
    %810 = vmatpush1.msra.mxu0 0.0
    %811 = vmatprep.subr.mxu0 0.0
    %812 = vmatpush1.msra.mxu0 0.0
    %813 = vmatprep.subr.mxu0 0.0
    %814 = vmatpush1.msra.mxu0 0.0
    %815 = vmatprep.subr.mxu0 0.0
    %816 = vmatpush1.msra.mxu0 0.0
    %817 = vmatprep.subr.mxu0 0.0
    %818 = vmatpush1.msra.mxu0 0.0
    %819 = vmatprep.subr.mxu0 0.0
    %820 = vmatpush1.msra.mxu0 0.0
    %821 = vmatprep.subr.mxu0 0.0
    %822 = vmatpush1.msra.mxu0 0.0
    %823 = vmatprep.subr.mxu0 0.0
    %824 = vmatpush1.msra.mxu0 0.0
    %825 = vmatprep.subr.mxu0 0.0
    %826 = vmatpush1.msra.mxu0 0.0
    %827 = vmatprep.mubr.f32.mxu0 0.0
    %828 = vmatmul.mubr.f32.gmra.mrb[0].mxu0 %v761
    %v829 = vpop.f32.mrb[0].mxu0
    %v830 = vadd.f32 %v145, %v829
    %v831 = vpop.f32.mrb[0].mxu0
    %832 = vdwg.mxu0
    %v833 = vxor.u32 %v830, 2147483648
    %v834 = vmul.f32 %v833, 1.442695
    %v835 = vpow.pop %v834
    %v836 = vadd.f32 %v835, 1.0
    %v837 = vrcp.pop %v836
    %v838 = vmul.f32 1.0, %v837
    %v839 = vtanh.pop %v830
    %v840 = vmul.f32 %v838, %v646
    %842 = vrot.lane.b32.xlu0 %v839, 64
    %v843 = vpop.permute.xlu0 %842
    %v845 = vmul.f32 %v838, %v843
    %847 = vrot.lane.b32.xlu0 %v845, 32
    %v848 = vpop.permute.xlu0 %847
    %v850 = vadd.f32 %v840, %v848
    %v851 = vtanh.pop %v850
    %853 = vrot.lane.b32.xlu0 %v851, 64
    %v854 = vpop.permute.xlu0 %853
    %v856 = vmul.f32 %v838, %v854
    %s857 = scalar_lea.vmem %s0, 8
    %v858 = vld [vmem:[%s857] sm:$0x3]
    %v859 = vsel %vm38, %v753, 0
    %861 = vmatprep.subr.mxu0 0.0
    %862 = vmatpush1.msra.mxu0 %v24
    %863 = vmatprep.subr.mxu0 0.0
    %864 = vmatpush1.msra.mxu0 %v25
    %865 = vmatprep.subr.mxu0 0.0
    %866 = vmatpush1.msra.mxu0 %v26
    %867 = vmatprep.subr.mxu0 0.0
    %868 = vmatpush1.msra.mxu0 %v27
    %869 = vmatprep.subr.mxu0 0.0
    %870 = vmatpush1.msra.mxu0 0.0
    %871 = vmatprep.subr.mxu0 0.0
    %872 = vmatpush1.msra.mxu0 0.0
    %873 = vmatprep.subr.mxu0 0.0
    %874 = vmatpush1.msra.mxu0 0.0
    %875 = vmatprep.subr.mxu0 0.0
    %876 = vmatpush1.msra.mxu0 0.0
    %877 = vmatprep.subr.mxu0 0.0
    %878 = vmatpush1.msra.mxu0 0.0
    %879 = vmatprep.subr.mxu0 0.0
    %880 = vmatpush1.msra.mxu0 0.0
    %881 = vmatprep.subr.mxu0 0.0
    %882 = vmatpush1.msra.mxu0 0.0
    %883 = vmatprep.subr.mxu0 0.0
    %884 = vmatpush1.msra.mxu0 0.0
    %885 = vmatprep.subr.mxu0 0.0
    %886 = vmatpush1.msra.mxu0 0.0
    %887 = vmatprep.subr.mxu0 0.0
    %888 = vmatpush1.msra.mxu0 0.0
    %889 = vmatprep.subr.mxu0 0.0
    %890 = vmatpush1.msra.mxu0 0.0
    %891 = vmatprep.subr.mxu0 0.0
    %892 = vmatpush1.msra.mxu0 0.0
    %893 = vmatprep.subr.mxu0 0.0
    %894 = vmatpush1.msra.mxu0 0.0
    %895 = vmatprep.subr.mxu0 0.0
    %896 = vmatpush1.msra.mxu0 0.0
    %897 = vmatprep.subr.mxu0 0.0
    %898 = vmatpush1.msra.mxu0 0.0
    %899 = vmatprep.subr.mxu0 0.0
    %900 = vmatpush1.msra.mxu0 0.0
    %901 = vmatprep.subr.mxu0 0.0
    %902 = vmatpush1.msra.mxu0 0.0
    %903 = vmatprep.subr.mxu0 0.0
    %904 = vmatpush1.msra.mxu0 0.0
    %905 = vmatprep.subr.mxu0 0.0
    %906 = vmatpush1.msra.mxu0 0.0
    %907 = vmatprep.subr.mxu0 0.0
    %908 = vmatpush1.msra.mxu0 0.0
    %909 = vmatprep.subr.mxu0 0.0
    %910 = vmatpush1.msra.mxu0 0.0
    %911 = vmatprep.subr.mxu0 0.0
    %912 = vmatpush1.msra.mxu0 0.0
    %913 = vmatprep.subr.mxu0 0.0
    %914 = vmatpush1.msra.mxu0 0.0
    %915 = vmatprep.subr.mxu0 0.0
    %916 = vmatpush1.msra.mxu0 0.0
    %917 = vmatprep.subr.mxu0 0.0
    %918 = vmatpush1.msra.mxu0 0.0
    %919 = vmatprep.subr.mxu0 0.0
    %920 = vmatpush1.msra.mxu0 0.0
    %921 = vmatprep.subr.mxu0 0.0
    %922 = vmatpush1.msra.mxu0 0.0
    %923 = vmatprep.subr.mxu0 0.0
    %924 = vmatpush1.msra.mxu0 0.0
    %925 = vmatprep.mubr.f32.mxu0 0.0
    %926 = vmatmul.mubr.f32.gmra.mrb[0].mxu0 %v859
    %v927 = vpop.f32.mrb[0].mxu0
    %v928 = vadd.f32 %v858, %v927
    %v929 = vpop.f32.mrb[0].mxu0
    %930 = vdwg.mxu0
    %v931 = vxor.u32 %v928, 2147483648
    %v932 = vmul.f32 %v931, 1.442695
    %v933 = vpow.pop %v932
    %v934 = vadd.f32 %v933, 1.0
    %v935 = vrcp.pop %v934
    %v936 = vmul.f32 1.0, %v935
    %v937 = vtanh.pop %v928
    %v938 = vmul.f32 %v936, %v744
    %940 = vrot.lane.b32.xlu0 %v937, 64
    %v941 = vpop.permute.xlu0 %940
    %v943 = vmul.f32 %v936, %v941
    %945 = vrot.lane.b32.xlu0 %v943, 32
    %v946 = vpop.permute.xlu0 %945
    %v948 = vadd.f32 %v938, %v946
    %v949 = vtanh.pop %v948
    %951 = vrot.lane.b32.xlu0 %v949, 64
    %v952 = vpop.permute.xlu0 %951
    %v954 = vmul.f32 %v936, %v952
    %956 = vrot.lane.b32.xlu0 %v954, 32
    %v957 = vpop.permute.xlu0 %956
    %960 = vrot.lane.b32.xlu0 %v856, 64
    %v961 = vpop.permute.xlu0 %960
    %v963 = vsel %vm38, %v957, %v961
    %v965 = vsel %vm147, %v963, 0
    %967 = vmatprep.subr.mxu0 0.0
    %968 = vmatpush1.msra.mxu0 %v28
    %969 = vmatprep.subr.mxu0 0.0
    %970 = vmatpush1.msra.mxu0 %v29
    %971 = vmatprep.subr.mxu0 0.0
    %972 = vmatpush1.msra.mxu0 %v30
    %973 = vmatprep.subr.mxu0 0.0
    %974 = vmatpush1.msra.mxu0 %v31
    %975 = vmatprep.subr.mxu0 0.0
    %976 = vmatpush1.msra.mxu0 %v32
    %977 = vmatprep.subr.mxu0 0.0
    %978 = vmatpush1.msra.mxu0 %v33
    %979 = vmatprep.subr.mxu0 0.0
    %980 = vmatpush1.msra.mxu0 %v34
    %981 = vmatprep.subr.mxu0 0.0
    %982 = vmatpush1.msra.mxu0 %v35
    %983 = vmatprep.subr.mxu0 0.0
    %984 = vmatpush1.msra.mxu0 0.0
    %985 = vmatprep.subr.mxu0 0.0
    %986 = vmatpush1.msra.mxu0 0.0
    %987 = vmatprep.subr.mxu0 0.0
    %988 = vmatpush1.msra.mxu0 0.0
    %989 = vmatprep.subr.mxu0 0.0
    %990 = vmatpush1.msra.mxu0 0.0
    %991 = vmatprep.subr.mxu0 0.0
    %992 = vmatpush1.msra.mxu0 0.0
    %993 = vmatprep.subr.mxu0 0.0
    %994 = vmatpush1.msra.mxu0 0.0
    %995 = vmatprep.subr.mxu0 0.0
    %996 = vmatpush1.msra.mxu0 0.0
    %997 = vmatprep.subr.mxu0 0.0
    %998 = vmatpush1.msra.mxu0 0.0
    %999 = vmatprep.subr.mxu0 0.0
    %1000 = vmatpush1.msra.mxu0 0.0
    %1001 = vmatprep.subr.mxu0 0.0
    %1002 = vmatpush1.msra.mxu0 0.0
    %1003 = vmatprep.subr.mxu0 0.0
    %1004 = vmatpush1.msra.mxu0 0.0
    %1005 = vmatprep.subr.mxu0 0.0
    %1006 = vmatpush1.msra.mxu0 0.0
    %1007 = vmatprep.subr.mxu0 0.0
    %1008 = vmatpush1.msra.mxu0 0.0
    %1009 = vmatprep.subr.mxu0 0.0
    %1010 = vmatpush1.msra.mxu0 0.0
    %1011 = vmatprep.subr.mxu0 0.0
    %1012 = vmatpush1.msra.mxu0 0.0
    %1013 = vmatprep.subr.mxu0 0.0
    %1014 = vmatpush1.msra.mxu0 0.0
    %1015 = vmatprep.subr.mxu0 0.0
    %1016 = vmatpush1.msra.mxu0 0.0
    %1017 = vmatprep.subr.mxu0 0.0
    %1018 = vmatpush1.msra.mxu0 0.0
    %1019 = vmatprep.subr.mxu0 0.0
    %1020 = vmatpush1.msra.mxu0 0.0
    %1021 = vmatprep.subr.mxu0 0.0
    %1022 = vmatpush1.msra.mxu0 0.0
    %1023 = vmatprep.subr.mxu0 0.0
    %1024 = vmatpush1.msra.mxu0 0.0
    %1025 = vmatprep.subr.mxu0 0.0
    %1026 = vmatpush1.msra.mxu0 0.0
    %1027 = vmatprep.subr.mxu0 0.0
    %1028 = vmatpush1.msra.mxu0 0.0
    %1029 = vmatprep.subr.mxu0 0.0
    %1030 = vmatpush1.msra.mxu0 0.0
    %1031 = vmatprep.mubr.f32.mxu0 0.0
    %1032 = vmatmul.mubr.f32.gmra.mrb[0].mxu0 %v965
    %v1033 = vpop.f32.mrb[0].mxu0
    %v1034 = vadd.f32 %v145, %v1033
    %v1035 = vpop.f32.mrb[0].mxu0
    %1036 = vdwg.mxu0
    %v1037 = vxor.u32 %v1034, 2147483648
    %v1038 = vmul.f32 %v1037, 1.442695
    %v1039 = vpow.pop %v1038
    %v1040 = vadd.f32 %v1039, 1.0
    %v1041 = vrcp.pop %v1040
    %v1042 = vmul.f32 1.0, %v1041
    %v1043 = vtanh.pop %v1034
    %v1044 = vmul.f32 %v1042, %v850
    %1046 = vrot.lane.b32.xlu0 %v1043, 64
    %v1047 = vpop.permute.xlu0 %1046
    %v1049 = vmul.f32 %v1042, %v1047
    %1051 = vrot.lane.b32.xlu0 %v1049, 32
    %v1052 = vpop.permute.xlu0 %1051
    %v1054 = vadd.f32 %v1044, %v1052
    %v1055 = vtanh.pop %v1054
    %1057 = vrot.lane.b32.xlu0 %v1055, 64
    %v1058 = vpop.permute.xlu0 %1057
    %v1060 = vmul.f32 %v1042, %v1058
    %s1061 = scalar_lea.vmem %s0, 10
    %v1062 = vld [vmem:[%s1061] sm:$0x3]
    %v1063 = vsel %vm38, %v957, 0
    %1065 = vmatprep.subr.mxu0 0.0
    %1066 = vmatpush1.msra.mxu0 %v24
    %1067 = vmatprep.subr.mxu0 0.0
    %1068 = vmatpush1.msra.mxu0 %v25
    %1069 = vmatprep.subr.mxu0 0.0
    %1070 = vmatpush1.msra.mxu0 %v26
    %1071 = vmatprep.subr.mxu0 0.0
    %1072 = vmatpush1.msra.mxu0 %v27
    %1073 = vmatprep.subr.mxu0 0.0
    %1074 = vmatpush1.msra.mxu0 0.0
    %1075 = vmatprep.subr.mxu0 0.0
    %1076 = vmatpush1.msra.mxu0 0.0
    %1077 = vmatprep.subr.mxu0 0.0
    %1078 = vmatpush1.msra.mxu0 0.0
    %1079 = vmatprep.subr.mxu0 0.0
    %1080 = vmatpush1.msra.mxu0 0.0
    %1081 = vmatprep.subr.mxu0 0.0
    %1082 = vmatpush1.msra.mxu0 0.0
    %1083 = vmatprep.subr.mxu0 0.0
    %1084 = vmatpush1.msra.mxu0 0.0
    %1085 = vmatprep.subr.mxu0 0.0
    %1086 = vmatpush1.msra.mxu0 0.0
    %1087 = vmatprep.subr.mxu0 0.0
    %1088 = vmatpush1.msra.mxu0 0.0
    %1089 = vmatprep.subr.mxu0 0.0
    %1090 = vmatpush1.msra.mxu0 0.0
    %1091 = vmatprep.subr.mxu0 0.0
    %1092 = vmatpush1.msra.mxu0 0.0
    %1093 = vmatprep.subr.mxu0 0.0
    %1094 = vmatpush1.msra.mxu0 0.0
    %1095 = vmatprep.subr.mxu0 0.0
    %1096 = vmatpush1.msra.mxu0 0.0
    %1097 = vmatprep.subr.mxu0 0.0
    %1098 = vmatpush1.msra.mxu0 0.0
    %1099 = vmatprep.subr.mxu0 0.0
    %1100 = vmatpush1.msra.mxu0 0.0
    %1101 = vmatprep.subr.mxu0 0.0
    %1102 = vmatpush1.msra.mxu0 0.0
    %1103 = vmatprep.subr.mxu0 0.0
    %1104 = vmatpush1.msra.mxu0 0.0
    %1105 = vmatprep.subr.mxu0 0.0
    %1106 = vmatpush1.msra.mxu0 0.0
    %1107 = vmatprep.subr.mxu0 0.0
    %1108 = vmatpush1.msra.mxu0 0.0
    %1109 = vmatprep.subr.mxu0 0.0
    %1110 = vmatpush1.msra.mxu0 0.0
    %1111 = vmatprep.subr.mxu0 0.0
    %1112 = vmatpush1.msra.mxu0 0.0
    %1113 = vmatprep.subr.mxu0 0.0
    %1114 = vmatpush1.msra.mxu0 0.0
    %1115 = vmatprep.subr.mxu0 0.0
    %1116 = vmatpush1.msra.mxu0 0.0
    %1117 = vmatprep.subr.mxu0 0.0
    %1118 = vmatpush1.msra.mxu0 0.0
    %1119 = vmatprep.subr.mxu0 0.0
    %1120 = vmatpush1.msra.mxu0 0.0
    %1121 = vmatprep.subr.mxu0 0.0
    %1122 = vmatpush1.msra.mxu0 0.0
    %1123 = vmatprep.subr.mxu0 0.0
    %1124 = vmatpush1.msra.mxu0 0.0
    %1125 = vmatprep.subr.mxu0 0.0
    %1126 = vmatpush1.msra.mxu0 0.0
    %1127 = vmatprep.subr.mxu0 0.0
    %1128 = vmatpush1.msra.mxu0 0.0
    %1129 = vmatprep.mubr.f32.mxu0 0.0
    %1130 = vmatmul.mubr.f32.gmra.mrb[0].mxu0 %v1063
    %v1131 = vpop.f32.mrb[0].mxu0
    %v1132 = vadd.f32 %v1062, %v1131
    %v1133 = vpop.f32.mrb[0].mxu0
    %1134 = vdwg.mxu0
    %v1135 = vxor.u32 %v1132, 2147483648
    %v1136 = vmul.f32 %v1135, 1.442695
    %v1137 = vpow.pop %v1136
    %v1138 = vadd.f32 %v1137, 1.0
    %v1139 = vrcp.pop %v1138
    %v1140 = vmul.f32 1.0, %v1139
    %v1141 = vtanh.pop %v1132
    %v1142 = vmul.f32 %v1140, %v948
    %1144 = vrot.lane.b32.xlu0 %v1141, 64
    %v1145 = vpop.permute.xlu0 %1144
    %v1147 = vmul.f32 %v1140, %v1145
    %1149 = vrot.lane.b32.xlu0 %v1147, 32
    %v1150 = vpop.permute.xlu0 %1149
    %v1152 = vadd.f32 %v1142, %v1150
    %v1153 = vtanh.pop %v1152
    %1155 = vrot.lane.b32.xlu0 %v1153, 64
    %v1156 = vpop.permute.xlu0 %1155
    %v1158 = vmul.f32 %v1140, %v1156
    %1160 = vrot.lane.b32.xlu0 %v1158, 32
    %v1161 = vpop.permute.xlu0 %1160
    %1164 = vrot.lane.b32.xlu0 %v1060, 64
    %v1165 = vpop.permute.xlu0 %1164
    %v1167 = vsel %vm38, %v1161, %v1165
    %v1169 = vsel %vm147, %v1167, 0
    %1171 = vmatprep.subr.mxu0 0.0
    %1172 = vmatpush1.msra.mxu0 %v28
    %1173 = vmatprep.subr.mxu0 0.0
    %1174 = vmatpush1.msra.mxu0 %v29
    %1175 = vmatprep.subr.mxu0 0.0
    %1176 = vmatpush1.msra.mxu0 %v30
    %1177 = vmatprep.subr.mxu0 0.0
    %1178 = vmatpush1.msra.mxu0 %v31
    %1179 = vmatprep.subr.mxu0 0.0
    %1180 = vmatpush1.msra.mxu0 %v32
    %1181 = vmatprep.subr.mxu0 0.0
    %1182 = vmatpush1.msra.mxu0 %v33
    %1183 = vmatprep.subr.mxu0 0.0
    %1184 = vmatpush1.msra.mxu0 %v34
    %1185 = vmatprep.subr.mxu0 0.0
    %1186 = vmatpush1.msra.mxu0 %v35
    %1187 = vmatprep.subr.mxu0 0.0
    %1188 = vmatpush1.msra.mxu0 0.0
    %1189 = vmatprep.subr.mxu0 0.0
    %1190 = vmatpush1.msra.mxu0 0.0
    %1191 = vmatprep.subr.mxu0 0.0
    %1192 = vmatpush1.msra.mxu0 0.0
    %1193 = vmatprep.subr.mxu0 0.0
    %1194 = vmatpush1.msra.mxu0 0.0
    %1195 = vmatprep.subr.mxu0 0.0
    %1196 = vmatpush1.msra.mxu0 0.0
    %1197 = vmatprep.subr.mxu0 0.0
    %1198 = vmatpush1.msra.mxu0 0.0
    %1199 = vmatprep.subr.mxu0 0.0
    %1200 = vmatpush1.msra.mxu0 0.0
    %1201 = vmatprep.subr.mxu0 0.0
    %1202 = vmatpush1.msra.mxu0 0.0
    %1203 = vmatprep.subr.mxu0 0.0
    %1204 = vmatpush1.msra.mxu0 0.0
    %1205 = vmatprep.subr.mxu0 0.0
    %1206 = vmatpush1.msra.mxu0 0.0
    %1207 = vmatprep.subr.mxu0 0.0
    %1208 = vmatpush1.msra.mxu0 0.0
    %1209 = vmatprep.subr.mxu0 0.0
    %1210 = vmatpush1.msra.mxu0 0.0
    %1211 = vmatprep.subr.mxu0 0.0
    %1212 = vmatpush1.msra.mxu0 0.0
    %1213 = vmatprep.subr.mxu0 0.0
    %1214 = vmatpush1.msra.mxu0 0.0
    %1215 = vmatprep.subr.mxu0 0.0
    %1216 = vmatpush1.msra.mxu0 0.0
    %1217 = vmatprep.subr.mxu0 0.0
    %1218 = vmatpush1.msra.mxu0 0.0
    %1219 = vmatprep.subr.mxu0 0.0
    %1220 = vmatpush1.msra.mxu0 0.0
    %1221 = vmatprep.subr.mxu0 0.0
    %1222 = vmatpush1.msra.mxu0 0.0
    %1223 = vmatprep.subr.mxu0 0.0
    %1224 = vmatpush1.msra.mxu0 0.0
    %1225 = vmatprep.subr.mxu0 0.0
    %1226 = vmatpush1.msra.mxu0 0.0
    %1227 = vmatprep.subr.mxu0 0.0
    %1228 = vmatpush1.msra.mxu0 0.0
    %1229 = vmatprep.subr.mxu0 0.0
    %1230 = vmatpush1.msra.mxu0 0.0
    %1231 = vmatprep.subr.mxu0 0.0
    %1232 = vmatpush1.msra.mxu0 0.0
    %1233 = vmatprep.subr.mxu0 0.0
    %1234 = vmatpush1.msra.mxu0 0.0
    %1235 = vmatprep.mubr.f32.mxu0 0.0
    %1236 = vmatmul.mubr.f32.gmra.mrb[0].mxu0 %v1169
    %v1237 = vpop.f32.mrb[0].mxu0
    %v1238 = vadd.f32 %v145, %v1237
    %v1239 = vpop.f32.mrb[0].mxu0
    %1240 = vdwg.mxu0
    %v1241 = vxor.u32 %v1238, 2147483648
    %v1242 = vmul.f32 %v1241, 1.442695
    %v1243 = vpow.pop %v1242
    %v1244 = vadd.f32 %v1243, 1.0
    %v1245 = vrcp.pop %v1244
    %v1246 = vmul.f32 1.0, %v1245
    %v1247 = vtanh.pop %v1238
    %v1248 = vmul.f32 %v1246, %v1054
    %1250 = vrot.lane.b32.xlu0 %v1247, 64
    %v1251 = vpop.permute.xlu0 %1250
    %v1253 = vmul.f32 %v1246, %v1251
    %1255 = vrot.lane.b32.xlu0 %v1253, 32
    %v1256 = vpop.permute.xlu0 %1255
    %v1258 = vadd.f32 %v1248, %v1256
    %v1259 = vtanh.pop %v1258
    %1261 = vrot.lane.b32.xlu0 %v1259, 64
    %v1262 = vpop.permute.xlu0 %1261
    %v1264 = vmul.f32 %v1246, %v1262
    %s1265 = scalar_lea.vmem %s0, 12
    %v1266 = vld [vmem:[%s1265] sm:$0x3]
    %v1267 = vsel %vm38, %v1161, 0
    %1269 = vmatprep.subr.mxu0 0.0
    %1270 = vmatpush1.msra.mxu0 %v24
    %1271 = vmatprep.subr.mxu0 0.0
    %1272 = vmatpush1.msra.mxu0 %v25
    %1273 = vmatprep.subr.mxu0 0.0
    %1274 = vmatpush1.msra.mxu0 %v26
    %1275 = vmatprep.subr.mxu0 0.0
    %1276 = vmatpush1.msra.mxu0 %v27
    %1277 = vmatprep.subr.mxu0 0.0
    %1278 = vmatpush1.msra.mxu0 0.0
    %1279 = vmatprep.subr.mxu0 0.0
    %1280 = vmatpush1.msra.mxu0 0.0
    %1281 = vmatprep.subr.mxu0 0.0
    %1282 = vmatpush1.msra.mxu0 0.0
    %1283 = vmatprep.subr.mxu0 0.0
    %1284 = vmatpush1.msra.mxu0 0.0
    %1285 = vmatprep.subr.mxu0 0.0
    %1286 = vmatpush1.msra.mxu0 0.0
    %1287 = vmatprep.subr.mxu0 0.0
    %1288 = vmatpush1.msra.mxu0 0.0
    %1289 = vmatprep.subr.mxu0 0.0
    %1290 = vmatpush1.msra.mxu0 0.0
    %1291 = vmatprep.subr.mxu0 0.0
    %1292 = vmatpush1.msra.mxu0 0.0
    %1293 = vmatprep.subr.mxu0 0.0
    %1294 = vmatpush1.msra.mxu0 0.0
    %1295 = vmatprep.subr.mxu0 0.0
    %1296 = vmatpush1.msra.mxu0 0.0
    %1297 = vmatprep.subr.mxu0 0.0
    %1298 = vmatpush1.msra.mxu0 0.0
    %1299 = vmatprep.subr.mxu0 0.0
    %1300 = vmatpush1.msra.mxu0 0.0
    %1301 = vmatprep.subr.mxu0 0.0
    %1302 = vmatpush1.msra.mxu0 0.0
    %1303 = vmatprep.subr.mxu0 0.0
    %1304 = vmatpush1.msra.mxu0 0.0
    %1305 = vmatprep.subr.mxu0 0.0
    %1306 = vmatpush1.msra.mxu0 0.0
    %1307 = vmatprep.subr.mxu0 0.0
    %1308 = vmatpush1.msra.mxu0 0.0
    %1309 = vmatprep.subr.mxu0 0.0
    %1310 = vmatpush1.msra.mxu0 0.0
    %1311 = vmatprep.subr.mxu0 0.0
    %1312 = vmatpush1.msra.mxu0 0.0
    %1313 = vmatprep.subr.mxu0 0.0
    %1314 = vmatpush1.msra.mxu0 0.0
    %1315 = vmatprep.subr.mxu0 0.0
    %1316 = vmatpush1.msra.mxu0 0.0
    %1317 = vmatprep.subr.mxu0 0.0
    %1318 = vmatpush1.msra.mxu0 0.0
    %1319 = vmatprep.subr.mxu0 0.0
    %1320 = vmatpush1.msra.mxu0 0.0
    %1321 = vmatprep.subr.mxu0 0.0
    %1322 = vmatpush1.msra.mxu0 0.0
    %1323 = vmatprep.subr.mxu0 0.0
    %1324 = vmatpush1.msra.mxu0 0.0
    %1325 = vmatprep.subr.mxu0 0.0
    %1326 = vmatpush1.msra.mxu0 0.0
    %1327 = vmatprep.subr.mxu0 0.0
    %1328 = vmatpush1.msra.mxu0 0.0
    %1329 = vmatprep.subr.mxu0 0.0
    %1330 = vmatpush1.msra.mxu0 0.0
    %1331 = vmatprep.subr.mxu0 0.0
    %1332 = vmatpush1.msra.mxu0 0.0
    %1333 = vmatprep.mubr.f32.mxu0 0.0
    %1334 = vmatmul.mubr.f32.gmra.mrb[0].mxu0 %v1267
    %v1335 = vpop.f32.mrb[0].mxu0
    %v1336 = vadd.f32 %v1266, %v1335
    %v1337 = vpop.f32.mrb[0].mxu0
    %1338 = vdwg.mxu0
    %v1339 = vxor.u32 %v1336, 2147483648
    %v1340 = vmul.f32 %v1339, 1.442695
    %v1341 = vpow.pop %v1340
    %v1342 = vadd.f32 %v1341, 1.0
    %v1343 = vrcp.pop %v1342
    %v1344 = vmul.f32 1.0, %v1343
    %v1345 = vtanh.pop %v1336
    %v1346 = vmul.f32 %v1344, %v1152
    %1348 = vrot.lane.b32.xlu0 %v1345, 64
    %v1349 = vpop.permute.xlu0 %1348
    %v1351 = vmul.f32 %v1344, %v1349
    %1353 = vrot.lane.b32.xlu0 %v1351, 32
    %v1354 = vpop.permute.xlu0 %1353
    %v1356 = vadd.f32 %v1346, %v1354
    %v1357 = vtanh.pop %v1356
    %1359 = vrot.lane.b32.xlu0 %v1357, 64
    %v1360 = vpop.permute.xlu0 %1359
    %v1362 = vmul.f32 %v1344, %v1360
    %1364 = vrot.lane.b32.xlu0 %v1362, 32
    %v1365 = vpop.permute.xlu0 %1364
    %1368 = vrot.lane.b32.xlu0 %v1264, 64
    %v1369 = vpop.permute.xlu0 %1368
    %v1371 = vsel %vm38, %v1365, %v1369
    %v1373 = vsel %vm147, %v1371, 0
    %1375 = vmatprep.subr.mxu0 0.0
    %1376 = vmatpush1.msra.mxu0 %v28
    %1377 = vmatprep.subr.mxu0 0.0
    %1378 = vmatpush1.msra.mxu0 %v29
    %1379 = vmatprep.subr.mxu0 0.0
    %1380 = vmatpush1.msra.mxu0 %v30
    %1381 = vmatprep.subr.mxu0 0.0
    %1382 = vmatpush1.msra.mxu0 %v31
    %1383 = vmatprep.subr.mxu0 0.0
    %1384 = vmatpush1.msra.mxu0 %v32
    %1385 = vmatprep.subr.mxu0 0.0
    %1386 = vmatpush1.msra.mxu0 %v33
    %1387 = vmatprep.subr.mxu0 0.0
    %1388 = vmatpush1.msra.mxu0 %v34
    %1389 = vmatprep.subr.mxu0 0.0
    %1390 = vmatpush1.msra.mxu0 %v35
    %1391 = vmatprep.subr.mxu0 0.0
    %1392 = vmatpush1.msra.mxu0 0.0
    %1393 = vmatprep.subr.mxu0 0.0
    %1394 = vmatpush1.msra.mxu0 0.0
    %1395 = vmatprep.subr.mxu0 0.0
    %1396 = vmatpush1.msra.mxu0 0.0
    %1397 = vmatprep.subr.mxu0 0.0
    %1398 = vmatpush1.msra.mxu0 0.0
    %1399 = vmatprep.subr.mxu0 0.0
    %1400 = vmatpush1.msra.mxu0 0.0
    %1401 = vmatprep.subr.mxu0 0.0
    %1402 = vmatpush1.msra.mxu0 0.0
    %1403 = vmatprep.subr.mxu0 0.0
    %1404 = vmatpush1.msra.mxu0 0.0
    %1405 = vmatprep.subr.mxu0 0.0
    %1406 = vmatpush1.msra.mxu0 0.0
    %1407 = vmatprep.subr.mxu0 0.0
    %1408 = vmatpush1.msra.mxu0 0.0
    %1409 = vmatprep.subr.mxu0 0.0
    %1410 = vmatpush1.msra.mxu0 0.0
    %1411 = vmatprep.subr.mxu0 0.0
    %1412 = vmatpush1.msra.mxu0 0.0
    %1413 = vmatprep.subr.mxu0 0.0
    %1414 = vmatpush1.msra.mxu0 0.0
    %1415 = vmatprep.subr.mxu0 0.0
    %1416 = vmatpush1.msra.mxu0 0.0
    %1417 = vmatprep.subr.mxu0 0.0
    %1418 = vmatpush1.msra.mxu0 0.0
    %1419 = vmatprep.subr.mxu0 0.0
    %1420 = vmatpush1.msra.mxu0 0.0
    %1421 = vmatprep.subr.mxu0 0.0
    %1422 = vmatpush1.msra.mxu0 0.0
    %1423 = vmatprep.subr.mxu0 0.0
    %1424 = vmatpush1.msra.mxu0 0.0
    %1425 = vmatprep.subr.mxu0 0.0
    %1426 = vmatpush1.msra.mxu0 0.0
    %1427 = vmatprep.subr.mxu0 0.0
    %1428 = vmatpush1.msra.mxu0 0.0
    %1429 = vmatprep.subr.mxu0 0.0
    %1430 = vmatpush1.msra.mxu0 0.0
    %1431 = vmatprep.subr.mxu0 0.0
    %1432 = vmatpush1.msra.mxu0 0.0
    %1433 = vmatprep.subr.mxu0 0.0
    %1434 = vmatpush1.msra.mxu0 0.0
    %1435 = vmatprep.subr.mxu0 0.0
    %1436 = vmatpush1.msra.mxu0 0.0
    %1437 = vmatprep.subr.mxu0 0.0
    %1438 = vmatpush1.msra.mxu0 0.0
    %1439 = vmatprep.mubr.f32.mxu0 0.0
    %1440 = vmatmul.mubr.f32.gmra.mrb[0].mxu0 %v1373
    %v1441 = vpop.f32.mrb[0].mxu0
    %v1442 = vadd.f32 %v145, %v1441
    %v1443 = vpop.f32.mrb[0].mxu0
    %1444 = vdwg.mxu0
    %v1445 = vxor.u32 %v1442, 2147483648
    %v1446 = vmul.f32 %v1445, 1.442695
    %v1447 = vpow.pop %v1446
    %v1448 = vadd.f32 %v1447, 1.0
    %v1449 = vrcp.pop %v1448
    %v1450 = vmul.f32 1.0, %v1449
    %v1451 = vtanh.pop %v1442
    %v1452 = vmul.f32 %v1450, %v1258
    %1454 = vrot.lane.b32.xlu0 %v1451, 64
    %v1455 = vpop.permute.xlu0 %1454
    %v1457 = vmul.f32 %v1450, %v1455
    %1459 = vrot.lane.b32.xlu0 %v1457, 32
    %v1460 = vpop.permute.xlu0 %1459
    %v1462 = vadd.f32 %v1452, %v1460
    %v1463 = vtanh.pop %v1462
    %1465 = vrot.lane.b32.xlu0 %v1463, 64
    %v1466 = vpop.permute.xlu0 %1465
    %v1468 = vmul.f32 %v1450, %v1466
    %s1469 = scalar_lea.vmem %s0, 14
    %v1470 = vld [vmem:[%s1469] sm:$0x3]
    %v1471 = vsel %vm38, %v1365, 0
    %1473 = vmatprep.subr.mxu0 0.0
    %1474 = vmatpush1.msra.mxu0 %v24
    %1475 = vmatprep.subr.mxu0 0.0
    %1476 = vmatpush1.msra.mxu0 %v25
    %1477 = vmatprep.subr.mxu0 0.0
    %1478 = vmatpush1.msra.mxu0 %v26
    %1479 = vmatprep.subr.mxu0 0.0
    %1480 = vmatpush1.msra.mxu0 %v27
    %1481 = vmatprep.subr.mxu0 0.0
    %1482 = vmatpush1.msra.mxu0 0.0
    %1483 = vmatprep.subr.mxu0 0.0
    %1484 = vmatpush1.msra.mxu0 0.0
    %1485 = vmatprep.subr.mxu0 0.0
    %1486 = vmatpush1.msra.mxu0 0.0
    %1487 = vmatprep.subr.mxu0 0.0
    %1488 = vmatpush1.msra.mxu0 0.0
    %1489 = vmatprep.subr.mxu0 0.0
    %1490 = vmatpush1.msra.mxu0 0.0
    %1491 = vmatprep.subr.mxu0 0.0
    %1492 = vmatpush1.msra.mxu0 0.0
    %1493 = vmatprep.subr.mxu0 0.0
    %1494 = vmatpush1.msra.mxu0 0.0
    %1495 = vmatprep.subr.mxu0 0.0
    %1496 = vmatpush1.msra.mxu0 0.0
    %1497 = vmatprep.subr.mxu0 0.0
    %1498 = vmatpush1.msra.mxu0 0.0
    %1499 = vmatprep.subr.mxu0 0.0
    %1500 = vmatpush1.msra.mxu0 0.0
    %1501 = vmatprep.subr.mxu0 0.0
    %1502 = vmatpush1.msra.mxu0 0.0
    %1503 = vmatprep.subr.mxu0 0.0
    %1504 = vmatpush1.msra.mxu0 0.0
    %1505 = vmatprep.subr.mxu0 0.0
    %1506 = vmatpush1.msra.mxu0 0.0
    %1507 = vmatprep.subr.mxu0 0.0
    %1508 = vmatpush1.msra.mxu0 0.0
    %1509 = vmatprep.subr.mxu0 0.0
    %1510 = vmatpush1.msra.mxu0 0.0
    %1511 = vmatprep.subr.mxu0 0.0
    %1512 = vmatpush1.msra.mxu0 0.0
    %1513 = vmatprep.subr.mxu0 0.0
    %1514 = vmatpush1.msra.mxu0 0.0
    %1515 = vmatprep.subr.mxu0 0.0
    %1516 = vmatpush1.msra.mxu0 0.0
    %1517 = vmatprep.subr.mxu0 0.0
    %1518 = vmatpush1.msra.mxu0 0.0
    %1519 = vmatprep.subr.mxu0 0.0
    %1520 = vmatpush1.msra.mxu0 0.0
    %1521 = vmatprep.subr.mxu0 0.0
    %1522 = vmatpush1.msra.mxu0 0.0
    %1523 = vmatprep.subr.mxu0 0.0
    %1524 = vmatpush1.msra.mxu0 0.0
    %1525 = vmatprep.subr.mxu0 0.0
    %1526 = vmatpush1.msra.mxu0 0.0
    %1527 = vmatprep.subr.mxu0 0.0
    %1528 = vmatpush1.msra.mxu0 0.0
    %1529 = vmatprep.subr.mxu0 0.0
    %1530 = vmatpush1.msra.mxu0 0.0
    %1531 = vmatprep.subr.mxu0 0.0
    %1532 = vmatpush1.msra.mxu0 0.0
    %1533 = vmatprep.subr.mxu0 0.0
    %1534 = vmatpush1.msra.mxu0 0.0
    %1535 = vmatprep.subr.mxu0 0.0
    %1536 = vmatpush1.msra.mxu0 0.0
    %1537 = vmatprep.mubr.f32.mxu0 0.0
    %1538 = vmatmul.mubr.f32.gmra.mrb[0].mxu0 %v1471
    %v1539 = vpop.f32.mrb[0].mxu0
    %v1540 = vadd.f32 %v1470, %v1539
    %v1541 = vpop.f32.mrb[0].mxu0
    %1542 = vdwg.mxu0
    %v1543 = vxor.u32 %v1540, 2147483648
    %v1544 = vmul.f32 %v1543, 1.442695
    %v1545 = vpow.pop %v1544
    %v1546 = vadd.f32 %v1545, 1.0
    %v1547 = vrcp.pop %v1546
    %v1548 = vmul.f32 1.0, %v1547
    %v1549 = vtanh.pop %v1540
    %v1550 = vmul.f32 %v1548, %v1356
    %1552 = vrot.lane.b32.xlu0 %v1549, 64
    %v1553 = vpop.permute.xlu0 %1552
    %v1555 = vmul.f32 %v1548, %v1553
    %1557 = vrot.lane.b32.xlu0 %v1555, 32
    %v1558 = vpop.permute.xlu0 %1557
    %v1560 = vadd.f32 %v1550, %v1558
    %v1561 = vtanh.pop %v1560
    %1563 = vrot.lane.b32.xlu0 %v1561, 64
    %v1564 = vpop.permute.xlu0 %1563
    %v1566 = vmul.f32 %v1548, %v1564
    %1568 = vrot.lane.b32.xlu0 %v1566, 32
    %v1569 = vpop.permute.xlu0 %1568
    %1572 = vrot.lane.b32.xlu0 %v1468, 64
    %v1573 = vpop.permute.xlu0 %1572
    %v1575 = vsel %vm38, %v1569, %v1573
    %v1577 = vsel %vm147, %v1575, 0
    %1579 = vmatprep.subr.mxu0 0.0
    %1580 = vmatpush1.msra.mxu0 %v28
    %1581 = vmatprep.subr.mxu0 0.0
    %1582 = vmatpush1.msra.mxu0 %v29
    %1583 = vmatprep.subr.mxu0 0.0
    %1584 = vmatpush1.msra.mxu0 %v30
    %1585 = vmatprep.subr.mxu0 0.0
    %1586 = vmatpush1.msra.mxu0 %v31
    %1587 = vmatprep.subr.mxu0 0.0
    %1588 = vmatpush1.msra.mxu0 %v32
    %1589 = vmatprep.subr.mxu0 0.0
    %1590 = vmatpush1.msra.mxu0 %v33
    %1591 = vmatprep.subr.mxu0 0.0
    %1592 = vmatpush1.msra.mxu0 %v34
    %1593 = vmatprep.subr.mxu0 0.0
    %1594 = vmatpush1.msra.mxu0 %v35
    %1595 = vmatprep.subr.mxu0 0.0
    %1596 = vmatpush1.msra.mxu0 0.0
    %1597 = vmatprep.subr.mxu0 0.0
    %1598 = vmatpush1.msra.mxu0 0.0
    %1599 = vmatprep.subr.mxu0 0.0
    %1600 = vmatpush1.msra.mxu0 0.0
    %1601 = vmatprep.subr.mxu0 0.0
    %1602 = vmatpush1.msra.mxu0 0.0
    %1603 = vmatprep.subr.mxu0 0.0
    %1604 = vmatpush1.msra.mxu0 0.0
    %1605 = vmatprep.subr.mxu0 0.0
    %1606 = vmatpush1.msra.mxu0 0.0
    %1607 = vmatprep.subr.mxu0 0.0
    %1608 = vmatpush1.msra.mxu0 0.0
    %1609 = vmatprep.subr.mxu0 0.0
    %1610 = vmatpush1.msra.mxu0 0.0
    %1611 = vmatprep.subr.mxu0 0.0
    %1612 = vmatpush1.msra.mxu0 0.0
    %1613 = vmatprep.subr.mxu0 0.0
    %1614 = vmatpush1.msra.mxu0 0.0
    %1615 = vmatprep.subr.mxu0 0.0
    %1616 = vmatpush1.msra.mxu0 0.0
    %1617 = vmatprep.subr.mxu0 0.0
    %1618 = vmatpush1.msra.mxu0 0.0
    %1619 = vmatprep.subr.mxu0 0.0
    %1620 = vmatpush1.msra.mxu0 0.0
    %1621 = vmatprep.subr.mxu0 0.0
    %1622 = vmatpush1.msra.mxu0 0.0
    %1623 = vmatprep.subr.mxu0 0.0
    %1624 = vmatpush1.msra.mxu0 0.0
    %1625 = vmatprep.subr.mxu0 0.0
    %1626 = vmatpush1.msra.mxu0 0.0
    %1627 = vmatprep.subr.mxu0 0.0
    %1628 = vmatpush1.msra.mxu0 0.0
    %1629 = vmatprep.subr.mxu0 0.0
    %1630 = vmatpush1.msra.mxu0 0.0
    %1631 = vmatprep.subr.mxu0 0.0
    %1632 = vmatpush1.msra.mxu0 0.0
    %1633 = vmatprep.subr.mxu0 0.0
    %1634 = vmatpush1.msra.mxu0 0.0
    %1635 = vmatprep.subr.mxu0 0.0
    %1636 = vmatpush1.msra.mxu0 0.0
    %1637 = vmatprep.subr.mxu0 0.0
    %1638 = vmatpush1.msra.mxu0 0.0
    %1639 = vmatprep.subr.mxu0 0.0
    %1640 = vmatpush1.msra.mxu0 0.0
    %1641 = vmatprep.subr.mxu0 0.0
    %1642 = vmatpush1.msra.mxu0 0.0
    %1643 = vmatprep.mubr.f32.mxu0 0.0
    %1644 = vmatmul.mubr.f32.gmra.mrb[0].mxu0 %v1577
    %v1645 = vpop.f32.mrb[0].mxu0
    %v1646 = vadd.f32 %v145, %v1645
    %v1647 = vpop.f32.mrb[0].mxu0
    %1648 = vdwg.mxu0
    %v1649 = vxor.u32 %v1646, 2147483648
    %v1650 = vmul.f32 %v1649, 1.442695
    %v1651 = vpow.pop %v1650
    %v1652 = vadd.f32 %v1651, 1.0
    %v1653 = vrcp.pop %v1652
    %v1654 = vmul.f32 1.0, %v1653
    %v1655 = vtanh.pop %v1646
    %v1656 = vmul.f32 %v1654, %v1462
    %1658 = vrot.lane.b32.xlu0 %v1655, 64
    %v1659 = vpop.permute.xlu0 %1658
    %v1661 = vmul.f32 %v1654, %v1659
    %1663 = vrot.lane.b32.xlu0 %v1661, 32
    %v1664 = vpop.permute.xlu0 %1663
    %v1666 = vadd.f32 %v1656, %v1664
    %v1667 = vtanh.pop %v1666
    %1669 = vrot.lane.b32.xlu0 %v1667, 64
    %v1670 = vpop.permute.xlu0 %1669
    %v1672 = vmul.f32 %v1654, %v1670
    %1674 = vrot.lane.b32.xlu0 %v1672, 32
    %v1675 = vpop.permute.xlu0 %1674
    %vm1677 = vcmask 254976
    %v1678 = vsel %vm1677, %v1675, 0.0
    %1679 = vadd.xlane.f32.xlu0 %v1678
    %v1680 = vpop.xlane.xlu0 %1679
    %v1681 = vrcp.pop 32.0
    %v1682 = vmul.f32 %v1680, %v1681
    %v1683 = vsub.f32 %v1672, %v1682
    %v1684 = vmul.f32 %v1683, %v1683
    %1686 = vrot.lane.b32.xlu0 %v1684, 32
    %v1687 = vpop.permute.xlu0 %1686
    %v1689 = vsel %vm1677, %v1687, 0.0
    %1690 = vadd.xlane.f32.xlu0 %v1689
    %v1691 = vpop.xlane.xlu0 %1690
    %v1692 = vmul.f32 %v1691, %v1681
    %v1693 = vadd.f32 %v1692, 1e-05
    %v1694 = vrsqrt.pop %v1693
    %v1695 = vmul.f32 %v1683, %v1694
    %v1696 = vld [vmem:[%s4] sm:$0x1]
    %v1698 = vlaneseq
    %v1699 = vshrl.u32 %v1698, 7
    %v1700 = vsub.s32 0, %v1699
    %v1701 = vrot.slane %v1696, %v1700
    %1702 = vrot.lane.b32.xlu0 %v1701, 96
    %v1703 = vpop.permute.xlu0 %1702
    %v1705 = vmul.f32 %v1695, %v1703
    %v1706 = vld [vmem:[%s5] sm:$0x1]
    %v1708 = vlaneseq
    %v1709 = vshrl.u32 %v1708, 7
    %v1710 = vsub.s32 0, %v1709
    %v1711 = vrot.slane %v1706, %v1710
    %1712 = vrot.lane.b32.xlu0 %v1711, 96
    %v1713 = vpop.permute.xlu0 %1712
    %v1715 = vadd.f32 %v1705, %v1713
    %1717 = vrot.lane.b32.xlu0 %v1715, 32
    %v1718 = vpop.permute.xlu0 %1717
    %1720 = vst.msk [vmem:[#allocation2] sm:$0x3] %vm1677, %v1718
    // Predicated region
    $region26: #{lstm_encoder_pallas.1} parent=1 // pred_check
      _
    $region27: #{lstm_encoder_pallas.1} parent=1 // pred_check_branch
      %1722 = sbr.rel (0) target = $region29
    $region28: #{lstm_encoder_pallas.1} parent=1 // pred_region
      %s1724 = ssub.s32 32, 32
      %1725 = vsyncadd [#allocation3], %s1724
      %s1727 = sshll.u32 [#allocation2], 4
      %s1728 = int_to_ptr.vmem [resolvable:$true] %s1727
      %1730 = dma.vmem_to_hbm [thread:$0]  %s1728, 32, %s6, [#allocation3]
    $region29: #{lstm_encoder_pallas.1} parent=1 // pred_fallthru
      _
    // Predicated region
    $region30: #{lstm_encoder_pallas.1} parent=1 // pred_check
      _
    $region31: #{lstm_encoder_pallas.1} parent=1 // pred_check_branch
      %1732 = sbr.rel (0) target = $region33
    $region32: #{lstm_encoder_pallas.1} parent=1 // pred_region
      %1733 = dma.done [#allocation3], 32
    $region33: #{lstm_encoder_pallas.1} parent=1 // pred_fallthru
      _
    %1734 = vsyncpa [#allocation3], 1

</llo_original>
